<compile_context>
chip_gen: v7x
topology: tpu7x:2x2x1
jax: 0.10.0
libtpu: 0.0.40
codegen_flags: <defaults>
</compile_context>

<pallas_src>
import jax
import jax.numpy as jnp
from jax.experimental import pallas as pl
from jax.experimental.pallas import tpu as pltpu


def _ceil_to(x, q):
    return ((x + q - 1) // q) * q


# ------------------------------------------------------------------ kernel --
def lstm_fc_kernel(x_ref, wih_ref, whh_ref, b_ref, wfc_ref, bfc_ref,
                   out_ref, xw_scr):
    """Whole LSTM sequence + final FC in one kernel invocation.

    x_ref   : (T*Bp, Ip)   time-major, batch padded to Bp, features to Ip
    wih_ref : (Ip, 4*Hp)   gate order (i, f, o, g); each gate padded to Hp lanes
    whh_ref : (Hp, 4*Hp)
    b_ref   : (1, 4*Hp)    b_ih + b_hh (padded gate lanes are exactly zero)
    wfc_ref : (Hp, Cp)     FC weight (padded rows/cols zero)
    bfc_ref : (1, Cp)
    out_ref : (Bp, Cp)
    xw_scr  : (T*Bp, 4*Hp) hoisted input projection (f32)
    """
    Bp, _Cp = out_ref.shape
    Hp = whh_ref.shape[0]
    T = x_ref.shape[0] // Bp

    # ---- hoisted input projection: ONE GEMM covering all timesteps ----
    xw_scr[...] = (jnp.dot(x_ref[...], wih_ref[...],
                           preferred_element_type=jnp.float32)
                   + b_ref[...])

    # ---- hoist the recurrent weight load out of the loop (resident in vregs
    #      for small Hp; at worst one load instead of T loads) ----
    whh = whh_ref[...]
    mm_dtype = whh.dtype

    # ---- recurrence: h/c carried as the fori_loop carry -> stay in vregs,
    #      no VMEM round-trip on the serial critical path ----
    h0 = jnp.zeros((Bp, Hp), jnp.float32)
    c0 = jnp.zeros((Bp, Hp), jnp.float32)

    def step(t, carry):
        h_prev, c_prev = carry
        row = pl.multiple_of(t * Bp, 8)
        gates = (xw_scr[pl.ds(row, Bp), :]
                 + jnp.dot(h_prev.astype(mm_dtype), whh,
                           preferred_element_type=jnp.float32))

        # gate columns are (i, f, o, g); every gate starts on a 128-lane vreg
        # boundary, so the slices below are full-vreg VPU/EUP work.
        ifo = jax.nn.sigmoid(gates[:, :3 * Hp])
        g_g = jnp.tanh(gates[:, 3 * Hp:])
        i_g = ifo[:, 0 * Hp:1 * Hp]
        f_g = ifo[:, 1 * Hp:2 * Hp]
        o_g = ifo[:, 2 * Hp:3 * Hp]

        c_new = f_g * c_prev + i_g * g_g
        h_new = o_g * jnp.tanh(c_new)
        return (h_new, c_new)

    # bounded unroll: full unroll only for short sequences, else factor 8
    unroll = True if T <= 16 else 8
    h_last, _ = jax.lax.fori_loop(0, T, step, (h0, c0), unroll=unroll)

    # ---- fc(out[:, -1, :]) ----
    out_ref[...] = (jnp.dot(h_last.astype(wfc_ref.dtype), wfc_ref[...],
                            preferred_element_type=jnp.float32)
                    + bfc_ref[...])


# ----------------------------------------------------------------- wrapper --
def _reorder_and_pad_gates(w, H, Hp):
    """Trailing 4H axis: PyTorch (i,f,g,o) -> (i,f,o,g), each gate zero-padded
    from H to Hp lanes so every gate begins on a 128-lane vreg boundary."""
    i, f, g, o = jnp.split(w, 4, axis=-1)
    pad = [(0, 0)] * (w.ndim - 1) + [(0, Hp - H)]
    return jnp.concatenate(
        [jnp.pad(i, pad), jnp.pad(f, pad), jnp.pad(o, pad), jnp.pad(g, pad)],
        axis=-1)


def lstm_model_forward(x, params, matmul_dtype=jnp.float32):
    """x: (B, T, I) float32 -> logits (B, C) float32.

    matmul_dtype=jnp.bfloat16 feeds the MXU at bf16 rate and halves x/weight
    DMA bytes; elementwise gate/state math stays f32 either way.
    """
    B, T, I = x.shape
    H = params["w_hh_t"].shape[0]
    C = params["w_fc_t"].shape[1]

    Bp = _ceil_to(B, 8)        # sublane quantum (f32)
    Ip = _ceil_to(I, 128)      # lane quantum for x / W_ih rows
    Hp = _ceil_to(H, 128)      # lane-aligned gate blocks + state width
    Cp = _ceil_to(C, 128)      # lane-dense unmasked FC stores

    # --- host-side weight prep (gate reorder + per-gate lane padding) ---
    w_ih_t = _reorder_and_pad_gates(params["w_ih_t"], H, Hp)        # (I, 4Hp)
    w_ih_t = jnp.pad(w_ih_t, ((0, Ip - I), (0, 0)))                 # (Ip, 4Hp)
    w_hh_t = _reorder_and_pad_gates(params["w_hh_t"], H, Hp)        # (H, 4Hp)
    w_hh_t = jnp.pad(w_hh_t, ((0, Hp - H), (0, 0)))                 # (Hp, 4Hp)
    b = _reorder_and_pad_gates(params["b"], H, Hp)                  # (1, 4Hp)
    w_fc_t = jnp.pad(params["w_fc_t"], ((0, Hp - H), (0, Cp - C)))  # (Hp, Cp)
    b_fc = jnp.pad(params["b_fc"], ((0, 0), (0, Cp - C)))           # (1, Cp)

    # --- time-major, batch+feature padded, flattened input: (T*Bp, Ip) ---
    x_tbi = jnp.transpose(x, (1, 0, 2))                             # (T, B, I)
    x_pad = jnp.pad(x_tbi, ((0, 0), (0, Bp - B), (0, Ip - I)))
    x_flat = x_pad.reshape(T * Bp, Ip)

    x_flat = x_flat.astype(matmul_dtype)
    w_ih_t = w_ih_t.astype(matmul_dtype)
    w_hh_t = w_hh_t.astype(matmul_dtype)
    w_fc_t = w_fc_t.astype(matmul_dtype)
    b = b.astype(jnp.float32)
    b_fc = b_fc.astype(jnp.float32)

    # --- scoped-VMEM sizing (v5e default is only 16 MiB) ---
    esz = jnp.dtype(matmul_dtype).itemsize
    vmem_bytes = (2 * T * Bp * Ip * esz            # x (double-buffered)
                  + T * Bp * 4 * Hp * 4            # xw scratch (f32)
                  + 2 * (Ip + Hp) * 4 * Hp * esz   # W_ih, W_hh
                  + 2 * Hp * Cp * esz              # W_fc
                  + 2 * (4 * Hp + Cp) * 4          # biases
                  + 2 * Bp * Cp * 4)               # out
    vmem_limit = int(min(max(vmem_bytes + (2 << 20), 16 << 20), 96 << 20))

    out = pl.pallas_call(
        lstm_fc_kernel,
        out_shape=jax.ShapeDtypeStruct((Bp, Cp), jnp.float32),
        grid_spec=pltpu.PrefetchScalarGridSpec(
            num_scalar_prefetch=0,
            grid=(1,),
            in_specs=[
                pl.BlockSpec((T * Bp, Ip), lambda i: (0, 0)),      # x (flat)
                pl.BlockSpec((Ip, 4 * Hp), lambda i: (0, 0)),      # W_ih^T
                pl.BlockSpec((Hp, 4 * Hp), lambda i: (0, 0)),      # W_hh^T
                pl.BlockSpec((1, 4 * Hp), lambda i: (0, 0)),       # bias
                pl.BlockSpec((Hp, Cp), lambda i: (0, 0)),          # W_fc^T
                pl.BlockSpec((1, Cp), lambda i: (0, 0)),           # b_fc
            ],
            out_specs=pl.BlockSpec((Bp, Cp), lambda i: (0, 0)),
            scratch_shapes=[
                pltpu.VMEM((T * Bp, 4 * Hp), jnp.float32),         # hoisted xW
            ],
        ),
        compiler_params=pltpu.CompilerParams(
            dimension_semantics=("arbitrary",),     # recurrence: sequential
            vmem_limit_bytes=vmem_limit),
    )(x_flat, w_ih_t, w_hh_t, b, w_fc_t, b_fc)

    return out[:B, :C]


# ------------------------------------------------------- pure-JAX reference --
def lstm_model_reference(x, params):
    """Reference uses the original PyTorch (i, f, g, o) gate ordering."""
    H = params["w_hh_t"].shape[0]
    B = x.shape[0]

    def step(carry, x_t):
        h, c = carry
        gates = x_t @ params["w_ih_t"] + h @ params["w_hh_t"] + params["b"][0]
        i_g = jax.nn.sigmoid(gates[:, 0 * H:1 * H])
        f_g = jax.nn.sigmoid(gates[:, 1 * H:2 * H])
        g_g = jnp.tanh(gates[:, 2 * H:3 * H])
        o_g = jax.nn.sigmoid(gates[:, 3 * H:4 * H])
        c = f_g * c + i_g * g_g
        h = o_g * jnp.tanh(c)
        return (h, c), None

    h0 = jnp.zeros((B, H), jnp.float32)
    c0 = jnp.zeros((B, H), jnp.float32)
    (h_last, _), _ = jax.lax.scan(step, (h0, c0), jnp.transpose(x, (1, 0, 2)))
    return h_last @ params["w_fc_t"] + params["b_fc"][0]


# -------------------------------------------------------------------- main --
def init_params(key, input_size, hidden_size, num_classes):
    """Deterministic init mirroring PyTorch's U(-1/sqrt(H), 1/sqrt(H))."""
    k = 1.0 / jnp.sqrt(jnp.float32(hidden_size))
    ks = jax.random.split(key, 6)
    u = lambda kk, shape: jax.random.uniform(kk, shape, jnp.float32, -k, k)
    w_ih = u(ks[0], (4 * hidden_size, input_size))   # PyTorch layout
    w_hh = u(ks[1], (4 * hidden_size, hidden_size))
    b_ih = u(ks[2], (4 * hidden_size,))
    b_hh = u(ks[3], (4 * hidden_size,))
    w_fc = u(ks[4], (num_classes, hidden_size))
    b_fc = u(ks[5], (num_classes,))
    return {
        "w_ih_t": w_ih.T,                                   # (I, 4H)
        "w_hh_t": w_hh.T,                                   # (H, 4H)
        "b": (b_ih + b_hh).reshape(1, 4 * hidden_size),     # (1, 4H)
        "w_fc_t": w_fc.T,                                   # (H, C)
        "b_fc": b_fc.reshape(1, num_classes),               # (1, C)
    }


if __name__ == "__main__":
    B, T = 2, 8                 # batch, sequence length
    input_size = 16
    hidden_size = 32
    num_classes = 4

    key = jax.random.PRNGKey(0)
    k_x, k_p = jax.random.split(key)
    x = jax.random.normal(k_x, (B, T, input_size), jnp.float32)
    params = init_params(k_p, input_size, hidden_size, num_classes)

    out = lstm_model_forward(x, params)          # f32 matmuls: exact vs ref
    out = jax.block_until_ready(out)

    ref = lstm_model_reference(x, params)
    assert out.shape == (B, num_classes)
    assert jnp.allclose(out, ref, rtol=1e-5, atol=1e-5), "mismatch vs reference"

    print("KERNEL_OK")
</pallas_src>

<mosaic_0001>
module attributes {stable_mosaic.version = 11 : i64} {
  func.func @lstm_fc_kernel(%arg0: i32, %arg1: memref<64x128xf32, #tpu.memory_space<vmem>>, %arg2: memref<128x512xf32, #tpu.memory_space<vmem>>, %arg3: memref<128x512xf32, #tpu.memory_space<vmem>>, %arg4: memref<1x512xf32, #tpu.memory_space<vmem>>, %arg5: memref<128x128xf32, #tpu.memory_space<vmem>>, %arg6: memref<1x128xf32, #tpu.memory_space<vmem>>, %arg7: memref<8x128xf32, #tpu.memory_space<vmem>>, %arg8: memref<64x512xf32, #tpu.memory_space<vmem>>) attributes {dimension_semantics = [#tpu.dimension_semantics<arbitrary>], iteration_bounds = array<i64: 1>, scalar_prefetch = 0 : i64, scratch_operands = 1 : i64, tpu.core_type = #tpu.core_type<tc>, window_params = [{pipeline_mode = #tpu.pipeline_mode<synchronous>, transform_indices = @transform_0, window_bounds = array<i64: 64, 128>}, {pipeline_mode = #tpu.pipeline_mode<synchronous>, transform_indices = @transform_1, window_bounds = array<i64: 128, 512>}, {pipeline_mode = #tpu.pipeline_mode<synchronous>, transform_indices = @transform_2, window_bounds = array<i64: 128, 512>}, {pipeline_mode = #tpu.pipeline_mode<synchronous>, transform_indices = @transform_3, window_bounds = array<i64: 1, 512>}, {pipeline_mode = #tpu.pipeline_mode<synchronous>, transform_indices = @transform_4, window_bounds = array<i64: 128, 128>}, {pipeline_mode = #tpu.pipeline_mode<synchronous>, transform_indices = @transform_5, window_bounds = array<i64: 1, 128>}, {pipeline_mode = #tpu.pipeline_mode<synchronous>, transform_indices = @transform_6, window_bounds = array<i64: 8, 128>}]} {
    %c0 = arith.constant 0 : index
    %c0_0 = arith.constant 0 : index
    %0 = vector.load %arg1[%c0, %c0_0] : memref<64x128xf32, #tpu.memory_space<vmem>>, vector<64x128xf32>
    %c0_1 = arith.constant 0 : index
    %c0_2 = arith.constant 0 : index
    %1 = vector.load %arg2[%c0_1, %c0_2] : memref<128x512xf32, #tpu.memory_space<vmem>>, vector<128x512xf32>
    %cst = arith.constant dense<0.000000e+00> : vector<64x512xf32>
    %2 = tpu.matmul %0, %1, %cst {dimension_numbers = #tpu.dot_dimension_numbers<[1], [0], [0], [1], [0, 0, 1, 1], [], []>} : vector<64x128xf32>, vector<128x512xf32>, vector<64x512xf32> -> vector<64x512xf32>
    %c0_3 = arith.constant 0 : index
    %c0_4 = arith.constant 0 : index
    %3 = vector.load %arg4[%c0_3, %c0_4] : memref<1x512xf32, #tpu.memory_space<vmem>>, vector<1x512xf32>
    %4 = vector.broadcast %3 : vector<1x512xf32> to vector<64x512xf32>
    %5 = arith.addf %2, %4 : vector<64x512xf32>
    %c0_5 = arith.constant 0 : index
    %c0_6 = arith.constant 0 : index
    %6 = vector.load %arg8[%c0_5, %c0_6] : memref<64x512xf32, #tpu.memory_space<vmem>>, vector<64x512xf32>
    tpu.vector_store %arg8[%c0_5, %c0_6], %5 {strides = array<i32>} : memref<64x512xf32, #tpu.memory_space<vmem>>, vector<64x512xf32>,
    %c0_7 = arith.constant 0 : index
    %c0_8 = arith.constant 0 : index
    %7 = vector.load %arg3[%c0_7, %c0_8] : memref<128x512xf32, #tpu.memory_space<vmem>>, vector<128x512xf32>
    %cst_9 = arith.constant 0.000000e+00 : f32
    %8 = vector.broadcast %cst_9 : f32 to vector<8x128xf32>
    %cst_10 = arith.constant 0.000000e+00 : f32
    %9 = vector.broadcast %cst_10 : f32 to vector<8x128xf32>
    %c0_i32 = arith.constant 0 : i32
    %c8_i32 = arith.constant 8 : i32
    %10 = arith.muli %c0_i32, %c8_i32 : i32
    %11 = tpu.assume_multiple %10, 8 : i32
    %12 = arith.index_cast %11 : i32 to index
    %c0_11 = arith.constant 0 : index
    %13 = vector.load %arg8[%12, %c0_11] : memref<64x512xf32, #tpu.memory_space<vmem>>, vector<8x512xf32>
    %cst_12 = arith.constant dense<0.000000e+00> : vector<8x512xf32>
    %14 = tpu.matmul %8, %7, %cst_12 {dimension_numbers = #tpu.dot_dimension_numbers<[1], [0], [0], [1], [0, 0, 1, 1], [], []>} : vector<8x128xf32>, vector<128x512xf32>, vector<8x512xf32> -> vector<8x512xf32>
    %15 = arith.addf %13, %14 : vector<8x512xf32>
    %16 = vector.extract_strided_slice %15 {offsets = [0, 0], sizes = [8, 384], strides = [1, 1]} : vector<8x512xf32> to vector<8x384xf32>
    %17 = arith.negf %16 : vector<8x384xf32>
    %18 = math.exp %17 : vector<8x384xf32>
    %cst_13 = arith.constant 1.000000e+00 : f32
    %19 = vector.broadcast %cst_13 : f32 to vector<8x384xf32>
    %20 = arith.addf %19, %18 : vector<8x384xf32>
    %21 = arith.divf %19, %20 : vector<8x384xf32>
    %22 = vector.extract_strided_slice %15 {offsets = [0, 384], sizes = [8, 128], strides = [1, 1]} : vector<8x512xf32> to vector<8x128xf32>
    %23 = math.tanh %22 : vector<8x128xf32>
    %24 = vector.extract_strided_slice %21 {offsets = [0, 0], sizes = [8, 128], strides = [1, 1]} : vector<8x384xf32> to vector<8x128xf32>
    %25 = vector.extract_strided_slice %21 {offsets = [0, 128], sizes = [8, 128], strides = [1, 1]} : vector<8x384xf32> to vector<8x128xf32>
    %26 = vector.extract_strided_slice %21 {offsets = [0, 256], sizes = [8, 128], strides = [1, 1]} : vector<8x384xf32> to vector<8x128xf32>
    %27 = arith.mulf %25, %9 : vector<8x128xf32>
    %28 = arith.mulf %24, %23 : vector<8x128xf32>
    %29 = arith.addf %27, %28 : vector<8x128xf32>
    %30 = math.tanh %29 : vector<8x128xf32>
    %31 = arith.mulf %26, %30 : vector<8x128xf32>
    %c1_i32 = arith.constant 1 : i32
    %c8_i32_14 = arith.constant 8 : i32
    %32 = arith.muli %c1_i32, %c8_i32_14 : i32
    %33 = tpu.assume_multiple %32, 8 : i32
    %34 = arith.index_cast %33 : i32 to index
    %c0_15 = arith.constant 0 : index
    %35 = vector.load %arg8[%34, %c0_15] : memref<64x512xf32, #tpu.memory_space<vmem>>, vector<8x512xf32>
    %cst_16 = arith.constant dense<0.000000e+00> : vector<8x512xf32>
    %36 = tpu.matmul %31, %7, %cst_16 {dimension_numbers = #tpu.dot_dimension_numbers<[1], [0], [0], [1], [0, 0, 1, 1], [], []>} : vector<8x128xf32>, vector<128x512xf32>, vector<8x512xf32> -> vector<8x512xf32>
    %37 = arith.addf %35, %36 : vector<8x512xf32>
    %38 = vector.extract_strided_slice %37 {offsets = [0, 0], sizes = [8, 384], strides = [1, 1]} : vector<8x512xf32> to vector<8x384xf32>
    %39 = arith.negf %38 : vector<8x384xf32>
    %40 = math.exp %39 : vector<8x384xf32>
    %cst_17 = arith.constant 1.000000e+00 : f32
    %41 = vector.broadcast %cst_17 : f32 to vector<8x384xf32>
    %42 = arith.addf %41, %40 : vector<8x384xf32>
    %43 = arith.divf %41, %42 : vector<8x384xf32>
    %44 = vector.extract_strided_slice %37 {offsets = [0, 384], sizes = [8, 128], strides = [1, 1]} : vector<8x512xf32> to vector<8x128xf32>
    %45 = math.tanh %44 : vector<8x128xf32>
    %46 = vector.extract_strided_slice %43 {offsets = [0, 0], sizes = [8, 128], strides = [1, 1]} : vector<8x384xf32> to vector<8x128xf32>
    %47 = vector.extract_strided_slice %43 {offsets = [0, 128], sizes = [8, 128], strides = [1, 1]} : vector<8x384xf32> to vector<8x128xf32>
    %48 = vector.extract_strided_slice %43 {offsets = [0, 256], sizes = [8, 128], strides = [1, 1]} : vector<8x384xf32> to vector<8x128xf32>
    %49 = arith.mulf %47, %29 : vector<8x128xf32>
    %50 = arith.mulf %46, %45 : vector<8x128xf32>
    %51 = arith.addf %49, %50 : vector<8x128xf32>
    %52 = math.tanh %51 : vector<8x128xf32>
    %53 = arith.mulf %48, %52 : vector<8x128xf32>
    %c2_i32 = arith.constant 2 : i32
    %c8_i32_18 = arith.constant 8 : i32
    %54 = arith.muli %c2_i32, %c8_i32_18 : i32
    %55 = tpu.assume_multiple %54, 8 : i32
    %56 = arith.index_cast %55 : i32 to index
    %c0_19 = arith.constant 0 : index
    %57 = vector.load %arg8[%56, %c0_19] : memref<64x512xf32, #tpu.memory_space<vmem>>, vector<8x512xf32>
    %cst_20 = arith.constant dense<0.000000e+00> : vector<8x512xf32>
    %58 = tpu.matmul %53, %7, %cst_20 {dimension_numbers = #tpu.dot_dimension_numbers<[1], [0], [0], [1], [0, 0, 1, 1], [], []>} : vector<8x128xf32>, vector<128x512xf32>, vector<8x512xf32> -> vector<8x512xf32>
    %59 = arith.addf %57, %58 : vector<8x512xf32>
    %60 = vector.extract_strided_slice %59 {offsets = [0, 0], sizes = [8, 384], strides = [1, 1]} : vector<8x512xf32> to vector<8x384xf32>
    %61 = arith.negf %60 : vector<8x384xf32>
    %62 = math.exp %61 : vector<8x384xf32>
    %cst_21 = arith.constant 1.000000e+00 : f32
    %63 = vector.broadcast %cst_21 : f32 to vector<8x384xf32>
    %64 = arith.addf %63, %62 : vector<8x384xf32>
    %65 = arith.divf %63, %64 : vector<8x384xf32>
    %66 = vector.extract_strided_slice %59 {offsets = [0, 384], sizes = [8, 128], strides = [1, 1]} : vector<8x512xf32> to vector<8x128xf32>
    %67 = math.tanh %66 : vector<8x128xf32>
    %68 = vector.extract_strided_slice %65 {offsets = [0, 0], sizes = [8, 128], strides = [1, 1]} : vector<8x384xf32> to vector<8x128xf32>
    %69 = vector.extract_strided_slice %65 {offsets = [0, 128], sizes = [8, 128], strides = [1, 1]} : vector<8x384xf32> to vector<8x128xf32>
    %70 = vector.extract_strided_slice %65 {offsets = [0, 256], sizes = [8, 128], strides = [1, 1]} : vector<8x384xf32> to vector<8x128xf32>
    %71 = arith.mulf %69, %51 : vector<8x128xf32>
    %72 = arith.mulf %68, %67 : vector<8x128xf32>
    %73 = arith.addf %71, %72 : vector<8x128xf32>
    %74 = math.tanh %73 : vector<8x128xf32>
    %75 = arith.mulf %70, %74 : vector<8x128xf32>
    %c3_i32 = arith.constant 3 : i32
    %c8_i32_22 = arith.constant 8 : i32
    %76 = arith.muli %c3_i32, %c8_i32_22 : i32
    %77 = tpu.assume_multiple %76, 8 : i32
    %78 = arith.index_cast %77 : i32 to index
    %c0_23 = arith.constant 0 : index
    %79 = vector.load %arg8[%78, %c0_23] : memref<64x512xf32, #tpu.memory_space<vmem>>, vector<8x512xf32>
    %cst_24 = arith.constant dense<0.000000e+00> : vector<8x512xf32>
    %80 = tpu.matmul %75, %7, %cst_24 {dimension_numbers = #tpu.dot_dimension_numbers<[1], [0], [0], [1], [0, 0, 1, 1], [], []>} : vector<8x128xf32>, vector<128x512xf32>, vector<8x512xf32> -> vector<8x512xf32>
    %81 = arith.addf %79, %80 : vector<8x512xf32>
    %82 = vector.extract_strided_slice %81 {offsets = [0, 0], sizes = [8, 384], strides = [1, 1]} : vector<8x512xf32> to vector<8x384xf32>
    %83 = arith.negf %82 : vector<8x384xf32>
    %84 = math.exp %83 : vector<8x384xf32>
    %cst_25 = arith.constant 1.000000e+00 : f32
    %85 = vector.broadcast %cst_25 : f32 to vector<8x384xf32>
    %86 = arith.addf %85, %84 : vector<8x384xf32>
    %87 = arith.divf %85, %86 : vector<8x384xf32>
    %88 = vector.extract_strided_slice %81 {offsets = [0, 384], sizes = [8, 128], strides = [1, 1]} : vector<8x512xf32> to vector<8x128xf32>
    %89 = math.tanh %88 : vector<8x128xf32>
    %90 = vector.extract_strided_slice %87 {offsets = [0, 0], sizes = [8, 128], strides = [1, 1]} : vector<8x384xf32> to vector<8x128xf32>
    %91 = vector.extract_strided_slice %87 {offsets = [0, 128], sizes = [8, 128], strides = [1, 1]} : vector<8x384xf32> to vector<8x128xf32>
    %92 = vector.extract_strided_slice %87 {offsets = [0, 256], sizes = [8, 128], strides = [1, 1]} : vector<8x384xf32> to vector<8x128xf32>
    %93 = arith.mulf %91, %73 : vector<8x128xf32>
    %94 = arith.mulf %90, %89 : vector<8x128xf32>
    %95 = arith.addf %93, %94 : vector<8x128xf32>
    %96 = math.tanh %95 : vector<8x128xf32>
    %97 = arith.mulf %92, %96 : vector<8x128xf32>
    %c4_i32 = arith.constant 4 : i32
    %c8_i32_26 = arith.constant 8 : i32
    %98 = arith.muli %c4_i32, %c8_i32_26 : i32
    %99 = tpu.assume_multiple %98, 8 : i32
    %100 = arith.index_cast %99 : i32 to index
    %c0_27 = arith.constant 0 : index
    %101 = vector.load %arg8[%100, %c0_27] : memref<64x512xf32, #tpu.memory_space<vmem>>, vector<8x512xf32>
    %cst_28 = arith.constant dense<0.000000e+00> : vector<8x512xf32>
    %102 = tpu.matmul %97, %7, %cst_28 {dimension_numbers = #tpu.dot_dimension_numbers<[1], [0], [0], [1], [0, 0, 1, 1], [], []>} : vector<8x128xf32>, vector<128x512xf32>, vector<8x512xf32> -> vector<8x512xf32>
    %103 = arith.addf %101, %102 : vector<8x512xf32>
    %104 = vector.extract_strided_slice %103 {offsets = [0, 0], sizes = [8, 384], strides = [1, 1]} : vector<8x512xf32> to vector<8x384xf32>
    %105 = arith.negf %104 : vector<8x384xf32>
    %106 = math.exp %105 : vector<8x384xf32>
    %cst_29 = arith.constant 1.000000e+00 : f32
    %107 = vector.broadcast %cst_29 : f32 to vector<8x384xf32>
    %108 = arith.addf %107, %106 : vector<8x384xf32>
    %109 = arith.divf %107, %108 : vector<8x384xf32>
    %110 = vector.extract_strided_slice %103 {offsets = [0, 384], sizes = [8, 128], strides = [1, 1]} : vector<8x512xf32> to vector<8x128xf32>
    %111 = math.tanh %110 : vector<8x128xf32>
    %112 = vector.extract_strided_slice %109 {offsets = [0, 0], sizes = [8, 128], strides = [1, 1]} : vector<8x384xf32> to vector<8x128xf32>
    %113 = vector.extract_strided_slice %109 {offsets = [0, 128], sizes = [8, 128], strides = [1, 1]} : vector<8x384xf32> to vector<8x128xf32>
    %114 = vector.extract_strided_slice %109 {offsets = [0, 256], sizes = [8, 128], strides = [1, 1]} : vector<8x384xf32> to vector<8x128xf32>
    %115 = arith.mulf %113, %95 : vector<8x128xf32>
    %116 = arith.mulf %112, %111 : vector<8x128xf32>
    %117 = arith.addf %115, %116 : vector<8x128xf32>
    %118 = math.tanh %117 : vector<8x128xf32>
    %119 = arith.mulf %114, %118 : vector<8x128xf32>
    %c5_i32 = arith.constant 5 : i32
    %c8_i32_30 = arith.constant 8 : i32
    %120 = arith.muli %c5_i32, %c8_i32_30 : i32
    %121 = tpu.assume_multiple %120, 8 : i32
    %122 = arith.index_cast %121 : i32 to index
    %c0_31 = arith.constant 0 : index
    %123 = vector.load %arg8[%122, %c0_31] : memref<64x512xf32, #tpu.memory_space<vmem>>, vector<8x512xf32>
    %cst_32 = arith.constant dense<0.000000e+00> : vector<8x512xf32>
    %124 = tpu.matmul %119, %7, %cst_32 {dimension_numbers = #tpu.dot_dimension_numbers<[1], [0], [0], [1], [0, 0, 1, 1], [], []>} : vector<8x128xf32>, vector<128x512xf32>, vector<8x512xf32> -> vector<8x512xf32>
    %125 = arith.addf %123, %124 : vector<8x512xf32>
    %126 = vector.extract_strided_slice %125 {offsets = [0, 0], sizes = [8, 384], strides = [1, 1]} : vector<8x512xf32> to vector<8x384xf32>
    %127 = arith.negf %126 : vector<8x384xf32>
    %128 = math.exp %127 : vector<8x384xf32>
    %cst_33 = arith.constant 1.000000e+00 : f32
    %129 = vector.broadcast %cst_33 : f32 to vector<8x384xf32>
    %130 = arith.addf %129, %128 : vector<8x384xf32>
    %131 = arith.divf %129, %130 : vector<8x384xf32>
    %132 = vector.extract_strided_slice %125 {offsets = [0, 384], sizes = [8, 128], strides = [1, 1]} : vector<8x512xf32> to vector<8x128xf32>
    %133 = math.tanh %132 : vector<8x128xf32>
    %134 = vector.extract_strided_slice %131 {offsets = [0, 0], sizes = [8, 128], strides = [1, 1]} : vector<8x384xf32> to vector<8x128xf32>
    %135 = vector.extract_strided_slice %131 {offsets = [0, 128], sizes = [8, 128], strides = [1, 1]} : vector<8x384xf32> to vector<8x128xf32>
    %136 = vector.extract_strided_slice %131 {offsets = [0, 256], sizes = [8, 128], strides = [1, 1]} : vector<8x384xf32> to vector<8x128xf32>
    %137 = arith.mulf %135, %117 : vector<8x128xf32>
    %138 = arith.mulf %134, %133 : vector<8x128xf32>
    %139 = arith.addf %137, %138 : vector<8x128xf32>
    %140 = math.tanh %139 : vector<8x128xf32>
    %141 = arith.mulf %136, %140 : vector<8x128xf32>
    %c6_i32 = arith.constant 6 : i32
    %c8_i32_34 = arith.constant 8 : i32
    %142 = arith.muli %c6_i32, %c8_i32_34 : i32
    %143 = tpu.assume_multiple %142, 8 : i32
    %144 = arith.index_cast %143 : i32 to index
    %c0_35 = arith.constant 0 : index
    %145 = vector.load %arg8[%144, %c0_35] : memref<64x512xf32, #tpu.memory_space<vmem>>, vector<8x512xf32>
    %cst_36 = arith.constant dense<0.000000e+00> : vector<8x512xf32>
    %146 = tpu.matmul %141, %7, %cst_36 {dimension_numbers = #tpu.dot_dimension_numbers<[1], [0], [0], [1], [0, 0, 1, 1], [], []>} : vector<8x128xf32>, vector<128x512xf32>, vector<8x512xf32> -> vector<8x512xf32>
    %147 = arith.addf %145, %146 : vector<8x512xf32>
    %148 = vector.extract_strided_slice %147 {offsets = [0, 0], sizes = [8, 384], strides = [1, 1]} : vector<8x512xf32> to vector<8x384xf32>
    %149 = arith.negf %148 : vector<8x384xf32>
    %150 = math.exp %149 : vector<8x384xf32>
    %cst_37 = arith.constant 1.000000e+00 : f32
    %151 = vector.broadcast %cst_37 : f32 to vector<8x384xf32>
    %152 = arith.addf %151, %150 : vector<8x384xf32>
    %153 = arith.divf %151, %152 : vector<8x384xf32>
    %154 = vector.extract_strided_slice %147 {offsets = [0, 384], sizes = [8, 128], strides = [1, 1]} : vector<8x512xf32> to vector<8x128xf32>
    %155 = math.tanh %154 : vector<8x128xf32>
    %156 = vector.extract_strided_slice %153 {offsets = [0, 0], sizes = [8, 128], strides = [1, 1]} : vector<8x384xf32> to vector<8x128xf32>
    %157 = vector.extract_strided_slice %153 {offsets = [0, 128], sizes = [8, 128], strides = [1, 1]} : vector<8x384xf32> to vector<8x128xf32>
    %158 = vector.extract_strided_slice %153 {offsets = [0, 256], sizes = [8, 128], strides = [1, 1]} : vector<8x384xf32> to vector<8x128xf32>
    %159 = arith.mulf %157, %139 : vector<8x128xf32>
    %160 = arith.mulf %156, %155 : vector<8x128xf32>
    %161 = arith.addf %159, %160 : vector<8x128xf32>
    %162 = math.tanh %161 : vector<8x128xf32>
    %163 = arith.mulf %158, %162 : vector<8x128xf32>
    %c7_i32 = arith.constant 7 : i32
    %c8_i32_38 = arith.constant 8 : i32
    %164 = arith.muli %c7_i32, %c8_i32_38 : i32
    %165 = tpu.assume_multiple %164, 8 : i32
    %166 = arith.index_cast %165 : i32 to index
    %c0_39 = arith.constant 0 : index
    %167 = vector.load %arg8[%166, %c0_39] : memref<64x512xf32, #tpu.memory_space<vmem>>, vector<8x512xf32>
    %cst_40 = arith.constant dense<0.000000e+00> : vector<8x512xf32>
    %168 = tpu.matmul %163, %7, %cst_40 {dimension_numbers = #tpu.dot_dimension_numbers<[1], [0], [0], [1], [0, 0, 1, 1], [], []>} : vector<8x128xf32>, vector<128x512xf32>, vector<8x512xf32> -> vector<8x512xf32>
    %169 = arith.addf %167, %168 : vector<8x512xf32>
    %170 = vector.extract_strided_slice %169 {offsets = [0, 0], sizes = [8, 384], strides = [1, 1]} : vector<8x512xf32> to vector<8x384xf32>
    %171 = arith.negf %170 : vector<8x384xf32>
    %172 = math.exp %171 : vector<8x384xf32>
    %cst_41 = arith.constant 1.000000e+00 : f32
    %173 = vector.broadcast %cst_41 : f32 to vector<8x384xf32>
    %174 = arith.addf %173, %172 : vector<8x384xf32>
    %175 = arith.divf %173, %174 : vector<8x384xf32>
    %176 = vector.extract_strided_slice %169 {offsets = [0, 384], sizes = [8, 128], strides = [1, 1]} : vector<8x512xf32> to vector<8x128xf32>
    %177 = math.tanh %176 : vector<8x128xf32>
    %178 = vector.extract_strided_slice %175 {offsets = [0, 0], sizes = [8, 128], strides = [1, 1]} : vector<8x384xf32> to vector<8x128xf32>
    %179 = vector.extract_strided_slice %175 {offsets = [0, 128], sizes = [8, 128], strides = [1, 1]} : vector<8x384xf32> to vector<8x128xf32>
    %180 = vector.extract_strided_slice %175 {offsets = [0, 256], sizes = [8, 128], strides = [1, 1]} : vector<8x384xf32> to vector<8x128xf32>
    %181 = arith.mulf %179, %161 : vector<8x128xf32>
    %182 = arith.mulf %178, %177 : vector<8x128xf32>
    %183 = arith.addf %181, %182 : vector<8x128xf32>
    %184 = math.tanh %183 : vector<8x128xf32>
    %185 = arith.mulf %180, %184 : vector<8x128xf32>
    %c8_i32_42 = arith.constant 8 : i32
    %c0_43 = arith.constant 0 : index
    %c0_44 = arith.constant 0 : index
    %186 = vector.load %arg5[%c0_43, %c0_44] : memref<128x128xf32, #tpu.memory_space<vmem>>, vector<128x128xf32>
    %cst_45 = arith.constant dense<0.000000e+00> : vector<8x128xf32>
    %187 = tpu.matmul %185, %186, %cst_45 {dimension_numbers = #tpu.dot_dimension_numbers<[1], [0], [0], [1], [0, 0, 1, 1], [], []>} : vector<8x128xf32>, vector<128x128xf32>, vector<8x128xf32> -> vector<8x128xf32>
    %c0_46 = arith.constant 0 : index
    %c0_47 = arith.constant 0 : index
    %188 = vector.load %arg6[%c0_46, %c0_47] : memref<1x128xf32, #tpu.memory_space<vmem>>, vector<1x128xf32>
    %189 = vector.broadcast %188 : vector<1x128xf32> to vector<8x128xf32>
    %190 = arith.addf %187, %189 : vector<8x128xf32>
    %c0_48 = arith.constant 0 : index
    %c0_49 = arith.constant 0 : index
    %191 = vector.load %arg7[%c0_48, %c0_49] : memref<8x128xf32, #tpu.memory_space<vmem>>, vector<8x128xf32>
    tpu.vector_store %arg7[%c0_48, %c0_49], %190 {strides = array<i32>} : memref<8x128xf32, #tpu.memory_space<vmem>>, vector<8x128xf32>,
    return
  }
  func.func @transform_0(%arg0: i32) -> (i32, i32) {
    %c0_i32 = arith.constant 0 : i32
    %c0_i32_0 = arith.constant 0 : i32
    %c0_i32_1 = arith.constant 0 : i32
    return %c0_i32, %c0_i32_0 : i32, i32
  }
  func.func @transform_1(%arg0: i32) -> (i32, i32) {
    %c0_i32 = arith.constant 0 : i32
    %c0_i32_0 = arith.constant 0 : i32
    %c0_i32_1 = arith.constant 0 : i32
    return %c0_i32, %c0_i32_0 : i32, i32
  }
  func.func @transform_2(%arg0: i32) -> (i32, i32) {
    %c0_i32 = arith.constant 0 : i32
    %c0_i32_0 = arith.constant 0 : i32
    %c0_i32_1 = arith.constant 0 : i32
    return %c0_i32, %c0_i32_0 : i32, i32
  }
  func.func @transform_3(%arg0: i32) -> (i32, i32) {
    %c0_i32 = arith.constant 0 : i32
    %c0_i32_0 = arith.constant 0 : i32
    %c0_i32_1 = arith.constant 0 : i32
    return %c0_i32, %c0_i32_0 : i32, i32
  }
  func.func @transform_4(%arg0: i32) -> (i32, i32) {
    %c0_i32 = arith.constant 0 : i32
    %c0_i32_0 = arith.constant 0 : i32
    %c0_i32_1 = arith.constant 0 : i32
    return %c0_i32, %c0_i32_0 : i32, i32
  }
  func.func @transform_5(%arg0: i32) -> (i32, i32) {
    %c0_i32 = arith.constant 0 : i32
    %c0_i32_0 = arith.constant 0 : i32
    %c0_i32_1 = arith.constant 0 : i32
    return %c0_i32, %c0_i32_0 : i32, i32
  }
  func.func @transform_6(%arg0: i32) -> (i32, i32) {
    %c0_i32 = arith.constant 0 : i32
    %c0_i32_0 = arith.constant 0 : i32
    %c0_i32_1 = arith.constant 0 : i32
    return %c0_i32, %c0_i32_0 : i32, i32
  }
}

</mosaic_0001>

<llo_original>
// kernel: tpu_custom_call.1
$region0: #{tpu_custom_call.1}
  #allocation0 [shape = 'u32[]', space=smem, size = 0x4, offset = 0x4, fixed_abs, tag = 'smem constant byte address 0x4 - core index']
  #allocation1 [shape = 'u32[144,128]{1,0:T(1,128)}', space=vmem, size = 0x12000, scoped, tag = 'internal scratch']
  #allocation2 [shape = 'f32[64,512]{1,0:T(8,128)}', space=vmem, size = 0x20000, scoped, tag = 'scratch operand']
  %s0 = inlined_call_operand.hbm [shape: f32[64,128], index: 0, kind: input, shape index: {}]
  %s1 = inlined_call_operand.hbm [shape: f32[128,512], index: 1, kind: input, shape index: {}]
  %s2 = inlined_call_operand.hbm [shape: f32[128,512], index: 2, kind: input, shape index: {}]
  %s3 = inlined_call_operand.vmem [shape: f32[1,512], index: 3, kind: input, shape index: {}]
  %s4 = inlined_call_operand.hbm [shape: f32[128,128], index: 4, kind: input, shape index: {}]
  %s5 = inlined_call_operand.vmem [shape: f32[1,128], index: 5, kind: input, shape index: {}]
  %s6 = inlined_call_operand.hbm [shape: f32[8,128], index: 6, kind: output, shape index: {}]
  %s7 = sld [smem:[#allocation0]]
  $region50: #{tpu_custom_call.1} parent=0
    _
  %s9 = ssub.s32 1, %s7
  %s10 = scalar_select 0, %s9, %s7
  $region1: #{tpu_custom_call.1} parent=0
    #allocation3 [shape = 'u8[32768]{0}', space=vmem, size = 0x8000, scoped, tag = 'input window, operand 0, single buffered']
    #allocation4 [shape = 's32[1]{0}', space=sflag, size = 0x4, scoped, tag = 'scoped memory for tpu_custom_call.1']
    #allocation5 [shape = 's32[1]{0}', space=sflag, size = 0x4, scoped, tag = 'scoped memory for tpu_custom_call.1']
    #allocation6 [shape = 'u8[262144]{0}', space=vmem, size = 0x40000, scoped, tag = 'input window, operand 1, single buffered']
    #allocation7 [shape = 's32[1]{0}', space=sflag, size = 0x4, scoped, tag = 'scoped memory for tpu_custom_call.1']
    #allocation8 [shape = 'u8[262144]{0}', space=vmem, size = 0x40000, scoped, tag = 'input window, operand 2, single buffered']
    #allocation9 [shape = 'u8[65536]{0}', space=vmem, size = 0x10000, scoped, tag = 'input window, operand 4, single buffered']
    #allocation10 [shape = 's32[1]{0}', space=sflag, size = 0x4, scoped, tag = 'scoped memory for tpu_custom_call.1']
    #allocation11 [shape = 'u8[4096]{0}', space=vmem, size = 0x1000, scoped, tag = 'output window, operand 0, single buffered']
    %11 = vsyncpa [#allocation4], 0
    %12 = vsyncpa [#allocation7], 0
    %13 = vsyncpa [#allocation10], 0
    %14 = vsyncpa [#allocation5], 0
    // Predicated region
    $region2: #{tpu_custom_call.1} parent=1 // pred_check
      _
    $region3: #{tpu_custom_call.1} parent=1 // pred_check_branch
      %16 = sbr.rel (0) target = $region5
    $region4: #{tpu_custom_call.1} parent=1 // pred_region
      %s18 = ssub.s32 1024, 1024
      %19 = vsyncadd [#allocation4], %s18
      %s20 = sshll.u32 [#allocation3], 4
      %s21 = int_to_ptr.vmem [resolvable:$true] %s20
      %26 = dma.hbm_to_vmem [thread:$0]  %s0, 1024, %s21, [#allocation4], 128, 128, 8
    $region5: #{tpu_custom_call.1} parent=1 // pred_fallthru
      _
    // Predicated region
    $region6: #{tpu_custom_call.1} parent=1 // pred_check
      _
    $region7: #{tpu_custom_call.1} parent=1 // pred_check_branch
      %28 = sbr.rel (0) target = $region9
    $region8: #{tpu_custom_call.1} parent=1 // pred_region
      %s30 = ssub.s32 8192, 8192
      %31 = vsyncadd [#allocation7], %s30
      %s32 = sshll.u32 [#allocation6], 4
      %s33 = int_to_ptr.vmem [resolvable:$true] %s32
      %38 = dma.hbm_to_vmem [thread:$0]  %s1, 8192, %s33, [#allocation7], 512, 512, 32
    $region9: #{tpu_custom_call.1} parent=1 // pred_fallthru
      _
    // Predicated region
    $region10: #{tpu_custom_call.1} parent=1 // pred_check
      _
    $region11: #{tpu_custom_call.1} parent=1 // pred_check_branch
      %40 = sbr.rel (0) target = $region13
    $region12: #{tpu_custom_call.1} parent=1 // pred_region
      %s42 = ssub.s32 8192, 8192
      %43 = vsyncadd [#allocation7], %s42
      %s44 = sshll.u32 [#allocation8], 4
      %s45 = int_to_ptr.vmem [resolvable:$true] %s44
      %50 = dma.hbm_to_vmem [thread:$0]  %s2, 8192, %s45, [#allocation7], 512, 512, 32
    $region13: #{tpu_custom_call.1} parent=1 // pred_fallthru
      _
    // Predicated region
    $region14: #{tpu_custom_call.1} parent=1 // pred_check
      _
    $region15: #{tpu_custom_call.1} parent=1 // pred_check_branch
      %52 = sbr.rel (0) target = $region17
    $region16: #{tpu_custom_call.1} parent=1 // pred_region
      _
    $region17: #{tpu_custom_call.1} parent=1 // pred_fallthru
      _
    // Predicated region
    $region18: #{tpu_custom_call.1} parent=1 // pred_check
      _
    $region19: #{tpu_custom_call.1} parent=1 // pred_check_branch
      %54 = sbr.rel (0) target = $region21
    $region20: #{tpu_custom_call.1} parent=1 // pred_region
      %s56 = ssub.s32 2048, 2048
      %57 = vsyncadd [#allocation10], %s56
      %s58 = sshll.u32 [#allocation9], 4
      %s59 = int_to_ptr.vmem [resolvable:$true] %s58
      %64 = dma.hbm_to_vmem [thread:$0]  %s4, 2048, %s59, [#allocation10], 128, 128, 8
    $region21: #{tpu_custom_call.1} parent=1 // pred_fallthru
      _
    // Predicated region
    $region22: #{tpu_custom_call.1} parent=1 // pred_check
      _
    $region23: #{tpu_custom_call.1} parent=1 // pred_check_branch
      %66 = sbr.rel (0) target = $region25
    $region24: #{tpu_custom_call.1} parent=1 // pred_region
      _
    $region25: #{tpu_custom_call.1} parent=1 // pred_fallthru
      _
    // Predicated region
    $region26: #{tpu_custom_call.1} parent=1 // pred_check
      _
    $region27: #{tpu_custom_call.1} parent=1 // pred_check_branch
      %68 = sbr.rel (0) target = $region29
    $region28: #{tpu_custom_call.1} parent=1 // pred_region
      %69 = dma.done [#allocation4], 1024
    $region29: #{tpu_custom_call.1} parent=1 // pred_fallthru
      _
    // Predicated region
    $region30: #{tpu_custom_call.1} parent=1 // pred_check
      _
    $region31: #{tpu_custom_call.1} parent=1 // pred_check_branch
      %71 = sbr.rel (0) target = $region33
    $region32: #{tpu_custom_call.1} parent=1 // pred_region
      %72 = dma.done [#allocation7], 8192
    $region33: #{tpu_custom_call.1} parent=1 // pred_fallthru
      _
    // Predicated region
    $region34: #{tpu_custom_call.1} parent=1 // pred_check
      _
    $region35: #{tpu_custom_call.1} parent=1 // pred_check_branch
      %74 = sbr.rel (0) target = $region37
    $region36: #{tpu_custom_call.1} parent=1 // pred_region
      %75 = dma.done [#allocation7], 8192
    $region37: #{tpu_custom_call.1} parent=1 // pred_fallthru
      _
    // Predicated region
    $region38: #{tpu_custom_call.1} parent=1 // pred_check
      _
    $region39: #{tpu_custom_call.1} parent=1 // pred_check_branch
      %77 = sbr.rel (0) target = $region41
    $region40: #{tpu_custom_call.1} parent=1 // pred_region
      %78 = dma.done [#allocation10], 2048
    $region41: #{tpu_custom_call.1} parent=1 // pred_fallthru
      _
    %v79 = vld [vmem:[#allocation3] sm:$0xff]
    %v80 = vld [vmem:[#allocation3 + $0x8] sm:$0xff]
    %v81 = vld [vmem:[#allocation3 + $0x10] sm:$0xff]
    %v82 = vld [vmem:[#allocation3 + $0x18] sm:$0xff]
    %v83 = vld [vmem:[#allocation3 + $0x20] sm:$0xff]
    %v84 = vld [vmem:[#allocation3 + $0x28] sm:$0xff]
    %v85 = vld [vmem:[#allocation3 + $0x30] sm:$0xff]
    %v86 = vld [vmem:[#allocation3 + $0x38] sm:$0xff]
    %v87 = vld [vmem:[#allocation6] sm:$0xff]
    %v88 = vld [vmem:[#allocation6 + $0x8] sm:$0xff]
    %v89 = vld [vmem:[#allocation6 + $0x10] sm:$0xff]
    %v90 = vld [vmem:[#allocation6 + $0x18] sm:$0xff]
    %v91 = vld [vmem:[#allocation6 + $0x20] sm:$0xff]
    %v92 = vld [vmem:[#allocation6 + $0x28] sm:$0xff]
    %v93 = vld [vmem:[#allocation6 + $0x30] sm:$0xff]
    %v94 = vld [vmem:[#allocation6 + $0x38] sm:$0xff]
    %v95 = vld [vmem:[#allocation6 + $0x40] sm:$0xff]
    %v96 = vld [vmem:[#allocation6 + $0x48] sm:$0xff]
    %v97 = vld [vmem:[#allocation6 + $0x50] sm:$0xff]
    %v98 = vld [vmem:[#allocation6 + $0x58] sm:$0xff]
    %v99 = vld [vmem:[#allocation6 + $0x60] sm:$0xff]
    %v100 = vld [vmem:[#allocation6 + $0x68] sm:$0xff]
    %v101 = vld [vmem:[#allocation6 + $0x70] sm:$0xff]
    %v102 = vld [vmem:[#allocation6 + $0x78] sm:$0xff]
    %v103 = vld [vmem:[#allocation6 + $0x80] sm:$0xff]
    %v104 = vld [vmem:[#allocation6 + $0x88] sm:$0xff]
    %v105 = vld [vmem:[#allocation6 + $0x90] sm:$0xff]
    %v106 = vld [vmem:[#allocation6 + $0x98] sm:$0xff]
    %v107 = vld [vmem:[#allocation6 + $0xa0] sm:$0xff]
    %v108 = vld [vmem:[#allocation6 + $0xa8] sm:$0xff]
    %v109 = vld [vmem:[#allocation6 + $0xb0] sm:$0xff]
    %v110 = vld [vmem:[#allocation6 + $0xb8] sm:$0xff]
    %v111 = vld [vmem:[#allocation6 + $0xc0] sm:$0xff]
    %v112 = vld [vmem:[#allocation6 + $0xc8] sm:$0xff]
    %v113 = vld [vmem:[#allocation6 + $0xd0] sm:$0xff]
    %v114 = vld [vmem:[#allocation6 + $0xd8] sm:$0xff]
    %v115 = vld [vmem:[#allocation6 + $0xe0] sm:$0xff]
    %v116 = vld [vmem:[#allocation6 + $0xe8] sm:$0xff]
    %v117 = vld [vmem:[#allocation6 + $0xf0] sm:$0xff]
    %v118 = vld [vmem:[#allocation6 + $0xf8] sm:$0xff]
    %v119 = vld [vmem:[#allocation6 + $0x100] sm:$0xff]
    %v120 = vld [vmem:[#allocation6 + $0x108] sm:$0xff]
    %v121 = vld [vmem:[#allocation6 + $0x110] sm:$0xff]
    %v122 = vld [vmem:[#allocation6 + $0x118] sm:$0xff]
    %v123 = vld [vmem:[#allocation6 + $0x120] sm:$0xff]
    %v124 = vld [vmem:[#allocation6 + $0x128] sm:$0xff]
    %v125 = vld [vmem:[#allocation6 + $0x130] sm:$0xff]
    %v126 = vld [vmem:[#allocation6 + $0x138] sm:$0xff]
    %v127 = vld [vmem:[#allocation6 + $0x140] sm:$0xff]
    %v128 = vld [vmem:[#allocation6 + $0x148] sm:$0xff]
    %v129 = vld [vmem:[#allocation6 + $0x150] sm:$0xff]
    %v130 = vld [vmem:[#allocation6 + $0x158] sm:$0xff]
    %v131 = vld [vmem:[#allocation6 + $0x160] sm:$0xff]
    %v132 = vld [vmem:[#allocation6 + $0x168] sm:$0xff]
    %v133 = vld [vmem:[#allocation6 + $0x170] sm:$0xff]
    %v134 = vld [vmem:[#allocation6 + $0x178] sm:$0xff]
    %v135 = vld [vmem:[#allocation6 + $0x180] sm:$0xff]
    %v136 = vld [vmem:[#allocation6 + $0x188] sm:$0xff]
    %v137 = vld [vmem:[#allocation6 + $0x190] sm:$0xff]
    %v138 = vld [vmem:[#allocation6 + $0x198] sm:$0xff]
    %v139 = vld [vmem:[#allocation6 + $0x1a0] sm:$0xff]
    %v140 = vld [vmem:[#allocation6 + $0x1a8] sm:$0xff]
    %v141 = vld [vmem:[#allocation6 + $0x1b0] sm:$0xff]
    %v142 = vld [vmem:[#allocation6 + $0x1b8] sm:$0xff]
    %v143 = vld [vmem:[#allocation6 + $0x1c0] sm:$0xff]
    %v144 = vld [vmem:[#allocation6 + $0x1c8] sm:$0xff]
    %v145 = vld [vmem:[#allocation6 + $0x1d0] sm:$0xff]
    %v146 = vld [vmem:[#allocation6 + $0x1d8] sm:$0xff]
    %v147 = vld [vmem:[#allocation6 + $0x1e0] sm:$0xff]
    %v148 = vld [vmem:[#allocation6 + $0x1e8] sm:$0xff]
    %v149 = vld [vmem:[#allocation6 + $0x1f0] sm:$0xff]
    %v150 = vld [vmem:[#allocation6 + $0x1f8] sm:$0xff]
    %v151 = vld [vmem:[%s3] sm:$0xf]
    %v153 = vlaneseq
    %v154 = vshrl.u32 %v153, 7
    %v155 = vsub.s32 0, %v154
    %v156 = vrot.slane %v151, %v155
    %v157 = vlaneseq
    %v158 = vshrl.u32 %v157, 7
    %v159 = vsub.s32 1, %v158
    %v160 = vrot.slane %v151, %v159
    %v161 = vlaneseq
    %v162 = vshrl.u32 %v161, 7
    %v163 = vsub.s32 2, %v162
    %v164 = vrot.slane %v151, %v163
    %v165 = vlaneseq
    %v166 = vshrl.u32 %v165, 7
    %v167 = vsub.s32 3, %v166
    %v168 = vrot.slane %v151, %v167
    %173 = vmatprep.subr.mxu0 %v88
    %174 = vmatpush1.msra.mxu0 %v87
    %175 = vmatprep.subr.mxu0 %v92
    %176 = vmatpush1.msra.mxu0 %v91
    %177 = vmatprep.subr.mxu0 %v96
    %178 = vmatpush1.msra.mxu0 %v95
    %179 = vmatprep.subr.mxu0 %v100
    %180 = vmatpush1.msra.mxu0 %v99
    %181 = vmatprep.subr.mxu0 %v104
    %182 = vmatpush1.msra.mxu0 %v103
    %183 = vmatprep.subr.mxu0 %v108
    %184 = vmatpush1.msra.mxu0 %v107
    %185 = vmatprep.subr.mxu0 %v112
    %186 = vmatpush1.msra.mxu0 %v111
    %187 = vmatprep.subr.mxu0 %v116
    %188 = vmatpush1.msra.mxu0 %v115
    %189 = vmatprep.subr.mxu0 %v120
    %190 = vmatpush1.msra.mxu0 %v119
    %191 = vmatprep.subr.mxu0 %v124
    %192 = vmatpush1.msra.mxu0 %v123
    %193 = vmatprep.subr.mxu0 %v128
    %194 = vmatpush1.msra.mxu0 %v127
    %195 = vmatprep.subr.mxu0 %v132
    %196 = vmatpush1.msra.mxu0 %v131
    %197 = vmatprep.subr.mxu0 %v136
    %198 = vmatpush1.msra.mxu0 %v135
    %199 = vmatprep.subr.mxu0 %v140
    %200 = vmatpush1.msra.mxu0 %v139
    %201 = vmatprep.subr.mxu0 %v144
    %202 = vmatpush1.msra.mxu0 %v143
    %203 = vmatprep.subr.mxu0 %v148
    %204 = vmatpush1.msra.mxu0 %v147
    %205 = vmatprep.subr.mxu0 0.0
    %206 = vmatpush1.msra.mxu0 0.0
    %207 = vmatprep.subr.mxu0 0.0
    %208 = vmatpush1.msra.mxu0 0.0
    %209 = vmatprep.subr.mxu0 0.0
    %210 = vmatpush1.msra.mxu0 0.0
    %211 = vmatprep.subr.mxu0 0.0
    %212 = vmatpush1.msra.mxu0 0.0
    %213 = vmatprep.subr.mxu0 0.0
    %214 = vmatpush1.msra.mxu0 0.0
    %215 = vmatprep.subr.mxu0 0.0
    %216 = vmatpush1.msra.mxu0 0.0
    %217 = vmatprep.subr.mxu0 0.0
    %218 = vmatpush1.msra.mxu0 0.0
    %219 = vmatprep.subr.mxu0 0.0
    %220 = vmatpush1.msra.mxu0 0.0
    %221 = vmatprep.subr.mxu0 0.0
    %222 = vmatpush1.msra.mxu0 0.0
    %223 = vmatprep.subr.mxu0 0.0
    %224 = vmatpush1.msra.mxu0 0.0
    %225 = vmatprep.subr.mxu0 0.0
    %226 = vmatpush1.msra.mxu0 0.0
    %227 = vmatprep.subr.mxu0 0.0
    %228 = vmatpush1.msra.mxu0 0.0
    %229 = vmatprep.subr.mxu0 0.0
    %230 = vmatpush1.msra.mxu0 0.0
    %231 = vmatprep.subr.mxu0 0.0
    %232 = vmatpush1.msra.mxu0 0.0
    %233 = vmatprep.subr.mxu0 0.0
    %234 = vmatpush1.msra.mxu0 0.0
    %235 = vmatprep.subr.mxu0 0.0
    %236 = vmatpush1.msra.mxu0 0.0
    %237 = vmatprep.mubr.f32.mxu0 0.0
    %238 = vmatmul.mubr.f32.gmra.mrb[0].mxu0 %v79
    %v239 = vpop.f32.mrb[0].mxu0
    %v240 = vadd.f32 %v156, %v239
    %v241 = vpop.f32.mrb[0].mxu0
    %v242 = vadd.f32 %v160, %v241
    %243 = vmatprep.mubr.f32.mxu0 0.0
    %244 = vmatmul.mubr.f32.gmra.mrb[0].mxu0 %v80
    %v245 = vpop.f32.mrb[0].mxu0
    %v246 = vadd.f32 %v156, %v245
    %v247 = vpop.f32.mrb[0].mxu0
    %v248 = vadd.f32 %v160, %v247
    %249 = vmatprep.mubr.f32.mxu0 0.0
    %250 = vmatmul.mubr.f32.gmra.mrb[0].mxu0 %v81
    %v251 = vpop.f32.mrb[0].mxu0
    %v252 = vadd.f32 %v156, %v251
    %v253 = vpop.f32.mrb[0].mxu0
    %v254 = vadd.f32 %v160, %v253
    %255 = vmatprep.mubr.f32.mxu0 0.0
    %256 = vmatmul.mubr.f32.gmra.mrb[0].mxu0 %v82
    %v257 = vpop.f32.mrb[0].mxu0
    %v258 = vadd.f32 %v156, %v257
    %v259 = vpop.f32.mrb[0].mxu0
    %v260 = vadd.f32 %v160, %v259
    %261 = vmatprep.mubr.f32.mxu0 0.0
    %262 = vmatmul.mubr.f32.gmra.mrb[0].mxu0 %v83
    %v263 = vpop.f32.mrb[0].mxu0
    %v264 = vadd.f32 %v156, %v263
    %v265 = vpop.f32.mrb[0].mxu0
    %v266 = vadd.f32 %v160, %v265
    %267 = vmatprep.mubr.f32.mxu0 0.0
    %268 = vmatmul.mubr.f32.gmra.mrb[0].mxu0 %v84
    %v269 = vpop.f32.mrb[0].mxu0
    %v270 = vadd.f32 %v156, %v269
    %v271 = vpop.f32.mrb[0].mxu0
    %v272 = vadd.f32 %v160, %v271
    %273 = vmatprep.mubr.f32.mxu0 0.0
    %274 = vmatmul.mubr.f32.gmra.mrb[0].mxu0 %v85
    %v275 = vpop.f32.mrb[0].mxu0
    %v276 = vadd.f32 %v156, %v275
    %v277 = vpop.f32.mrb[0].mxu0
    %v278 = vadd.f32 %v160, %v277
    %279 = vmatprep.mubr.f32.mxu0 0.0
    %280 = vmatmul.mubr.f32.gmra.mrb[0].mxu0 %v86
    %v281 = vpop.f32.mrb[0].mxu0
    %v282 = vadd.f32 %v156, %v281
    %v283 = vpop.f32.mrb[0].mxu0
    %v284 = vadd.f32 %v160, %v283
    %285 = vdwg.mxu0
    %286 = vmatprep.subr.mxu0 %v90
    %287 = vmatpush1.msra.mxu0 %v89
    %288 = vmatprep.subr.mxu0 %v94
    %289 = vmatpush1.msra.mxu0 %v93
    %290 = vmatprep.subr.mxu0 %v98
    %291 = vmatpush1.msra.mxu0 %v97
    %292 = vmatprep.subr.mxu0 %v102
    %293 = vmatpush1.msra.mxu0 %v101
    %294 = vmatprep.subr.mxu0 %v106
    %295 = vmatpush1.msra.mxu0 %v105
    %296 = vmatprep.subr.mxu0 %v110
    %297 = vmatpush1.msra.mxu0 %v109
    %298 = vmatprep.subr.mxu0 %v114
    %299 = vmatpush1.msra.mxu0 %v113
    %300 = vmatprep.subr.mxu0 %v118
    %301 = vmatpush1.msra.mxu0 %v117
    %302 = vmatprep.subr.mxu0 %v122
    %303 = vmatpush1.msra.mxu0 %v121
    %304 = vmatprep.subr.mxu0 %v126
    %305 = vmatpush1.msra.mxu0 %v125
    %306 = vmatprep.subr.mxu0 %v130
    %307 = vmatpush1.msra.mxu0 %v129
    %308 = vmatprep.subr.mxu0 %v134
    %309 = vmatpush1.msra.mxu0 %v133
    %310 = vmatprep.subr.mxu0 %v138
    %311 = vmatpush1.msra.mxu0 %v137
    %312 = vmatprep.subr.mxu0 %v142
    %313 = vmatpush1.msra.mxu0 %v141
    %314 = vmatprep.subr.mxu0 %v146
    %315 = vmatpush1.msra.mxu0 %v145
    %316 = vmatprep.subr.mxu0 %v150
    %317 = vmatpush1.msra.mxu0 %v149
    %318 = vmatprep.subr.mxu0 0.0
    %319 = vmatpush1.msra.mxu0 0.0
    %320 = vmatprep.subr.mxu0 0.0
    %321 = vmatpush1.msra.mxu0 0.0
    %322 = vmatprep.subr.mxu0 0.0
    %323 = vmatpush1.msra.mxu0 0.0
    %324 = vmatprep.subr.mxu0 0.0
    %325 = vmatpush1.msra.mxu0 0.0
    %326 = vmatprep.subr.mxu0 0.0
    %327 = vmatpush1.msra.mxu0 0.0
    %328 = vmatprep.subr.mxu0 0.0
    %329 = vmatpush1.msra.mxu0 0.0
    %330 = vmatprep.subr.mxu0 0.0
    %331 = vmatpush1.msra.mxu0 0.0
    %332 = vmatprep.subr.mxu0 0.0
    %333 = vmatpush1.msra.mxu0 0.0
    %334 = vmatprep.subr.mxu0 0.0
    %335 = vmatpush1.msra.mxu0 0.0
    %336 = vmatprep.subr.mxu0 0.0
    %337 = vmatpush1.msra.mxu0 0.0
    %338 = vmatprep.subr.mxu0 0.0
    %339 = vmatpush1.msra.mxu0 0.0
    %340 = vmatprep.subr.mxu0 0.0
    %341 = vmatpush1.msra.mxu0 0.0
    %342 = vmatprep.subr.mxu0 0.0
    %343 = vmatpush1.msra.mxu0 0.0
    %344 = vmatprep.subr.mxu0 0.0
    %345 = vmatpush1.msra.mxu0 0.0
    %346 = vmatprep.subr.mxu0 0.0
    %347 = vmatpush1.msra.mxu0 0.0
    %348 = vmatprep.subr.mxu0 0.0
    %349 = vmatpush1.msra.mxu0 0.0
    %350 = vmatprep.mubr.f32.mxu0 0.0
    %351 = vmatmul.mubr.f32.gmra.mrb[0].mxu0 %v79
    %v352 = vpop.f32.mrb[0].mxu0
    %v353 = vadd.f32 %v164, %v352
    %v354 = vpop.f32.mrb[0].mxu0
    %v355 = vadd.f32 %v168, %v354
    %356 = vmatprep.mubr.f32.mxu0 0.0
    %357 = vmatmul.mubr.f32.gmra.mrb[0].mxu0 %v80
    %v358 = vpop.f32.mrb[0].mxu0
    %v359 = vadd.f32 %v164, %v358
    %v360 = vpop.f32.mrb[0].mxu0
    %v361 = vadd.f32 %v168, %v360
    %362 = vmatprep.mubr.f32.mxu0 0.0
    %363 = vmatmul.mubr.f32.gmra.mrb[0].mxu0 %v81
    %v364 = vpop.f32.mrb[0].mxu0
    %v365 = vadd.f32 %v164, %v364
    %v366 = vpop.f32.mrb[0].mxu0
    %v367 = vadd.f32 %v168, %v366
    %368 = vmatprep.mubr.f32.mxu0 0.0
    %369 = vmatmul.mubr.f32.gmra.mrb[0].mxu0 %v82
    %v370 = vpop.f32.mrb[0].mxu0
    %v371 = vadd.f32 %v164, %v370
    %v372 = vpop.f32.mrb[0].mxu0
    %v373 = vadd.f32 %v168, %v372
    %374 = vmatprep.mubr.f32.mxu0 0.0
    %375 = vmatmul.mubr.f32.gmra.mrb[0].mxu0 %v83
    %v376 = vpop.f32.mrb[0].mxu0
    %v377 = vadd.f32 %v164, %v376
    %v378 = vpop.f32.mrb[0].mxu0
    %v379 = vadd.f32 %v168, %v378
    %380 = vmatprep.mubr.f32.mxu0 0.0
    %381 = vmatmul.mubr.f32.gmra.mrb[0].mxu0 %v84
    %v382 = vpop.f32.mrb[0].mxu0
    %v383 = vadd.f32 %v164, %v382
    %v384 = vpop.f32.mrb[0].mxu0
    %v385 = vadd.f32 %v168, %v384
    %386 = vmatprep.mubr.f32.mxu0 0.0
    %387 = vmatmul.mubr.f32.gmra.mrb[0].mxu0 %v85
    %v388 = vpop.f32.mrb[0].mxu0
    %v389 = vadd.f32 %v164, %v388
    %v390 = vpop.f32.mrb[0].mxu0
    %v391 = vadd.f32 %v168, %v390
    %392 = vmatprep.mubr.f32.mxu0 0.0
    %393 = vmatmul.mubr.f32.gmra.mrb[0].mxu0 %v86
    %v394 = vpop.f32.mrb[0].mxu0
    %v395 = vadd.f32 %v164, %v394
    %v396 = vpop.f32.mrb[0].mxu0
    %v397 = vadd.f32 %v168, %v396
    %398 = vdwg.mxu0
    %399 = vst [vmem:[#allocation2] sm:$0xff] %v240
    %400 = vst [vmem:[#allocation2 + $0x8] sm:$0xff] %v242
    %401 = vst [vmem:[#allocation2 + $0x10] sm:$0xff] %v353
    %402 = vst [vmem:[#allocation2 + $0x18] sm:$0xff] %v355
    %403 = vst [vmem:[#allocation2 + $0x20] sm:$0xff] %v246
    %404 = vst [vmem:[#allocation2 + $0x28] sm:$0xff] %v248
    %405 = vst [vmem:[#allocation2 + $0x30] sm:$0xff] %v359
    %406 = vst [vmem:[#allocation2 + $0x38] sm:$0xff] %v361
    %407 = vst [vmem:[#allocation2 + $0x40] sm:$0xff] %v252
    %408 = vst [vmem:[#allocation2 + $0x48] sm:$0xff] %v254
    %409 = vst [vmem:[#allocation2 + $0x50] sm:$0xff] %v365
    %410 = vst [vmem:[#allocation2 + $0x58] sm:$0xff] %v367
    %411 = vst [vmem:[#allocation2 + $0x60] sm:$0xff] %v258
    %412 = vst [vmem:[#allocation2 + $0x68] sm:$0xff] %v260
    %413 = vst [vmem:[#allocation2 + $0x70] sm:$0xff] %v371
    %414 = vst [vmem:[#allocation2 + $0x78] sm:$0xff] %v373
    %415 = vst [vmem:[#allocation2 + $0x80] sm:$0xff] %v264
    %416 = vst [vmem:[#allocation2 + $0x88] sm:$0xff] %v266
    %417 = vst [vmem:[#allocation2 + $0x90] sm:$0xff] %v377
    %418 = vst [vmem:[#allocation2 + $0x98] sm:$0xff] %v379
    %419 = vst [vmem:[#allocation2 + $0xa0] sm:$0xff] %v270
    %420 = vst [vmem:[#allocation2 + $0xa8] sm:$0xff] %v272
    %421 = vst [vmem:[#allocation2 + $0xb0] sm:$0xff] %v383
    %422 = vst [vmem:[#allocation2 + $0xb8] sm:$0xff] %v385
    %423 = vst [vmem:[#allocation2 + $0xc0] sm:$0xff] %v276
    %424 = vst [vmem:[#allocation2 + $0xc8] sm:$0xff] %v278
    %425 = vst [vmem:[#allocation2 + $0xd0] sm:$0xff] %v389
    %426 = vst [vmem:[#allocation2 + $0xd8] sm:$0xff] %v391
    %427 = vst [vmem:[#allocation2 + $0xe0] sm:$0xff] %v282
    %428 = vst [vmem:[#allocation2 + $0xe8] sm:$0xff] %v284
    %429 = vst [vmem:[#allocation2 + $0xf0] sm:$0xff] %v395
    %430 = vst [vmem:[#allocation2 + $0xf8] sm:$0xff] %v397
    %v431 = vld [vmem:[#allocation8] sm:$0xff]
    %v432 = vld [vmem:[#allocation8 + $0x8] sm:$0xff]
    %v433 = vld [vmem:[#allocation8 + $0x10] sm:$0xff]
    %v434 = vld [vmem:[#allocation8 + $0x18] sm:$0xff]
    %v435 = vld [vmem:[#allocation8 + $0x20] sm:$0xff]
    %v436 = vld [vmem:[#allocation8 + $0x28] sm:$0xff]
    %v437 = vld [vmem:[#allocation8 + $0x30] sm:$0xff]
    %v438 = vld [vmem:[#allocation8 + $0x38] sm:$0xff]
    %v439 = vld [vmem:[#allocation8 + $0x40] sm:$0xff]
    %v440 = vld [vmem:[#allocation8 + $0x48] sm:$0xff]
    %v441 = vld [vmem:[#allocation8 + $0x50] sm:$0xff]
    %v442 = vld [vmem:[#allocation8 + $0x58] sm:$0xff]
    %v443 = vld [vmem:[#allocation8 + $0x60] sm:$0xff]
    %v444 = vld [vmem:[#allocation8 + $0x68] sm:$0xff]
    %v445 = vld [vmem:[#allocation8 + $0x70] sm:$0xff]
    %v446 = vld [vmem:[#allocation8 + $0x78] sm:$0xff]
    %v447 = vld [vmem:[#allocation8 + $0x80] sm:$0xff]
    %v448 = vld [vmem:[#allocation8 + $0x88] sm:$0xff]
    %v449 = vld [vmem:[#allocation8 + $0x90] sm:$0xff]
    %v450 = vld [vmem:[#allocation8 + $0x98] sm:$0xff]
    %v451 = vld [vmem:[#allocation8 + $0xa0] sm:$0xff]
    %v452 = vld [vmem:[#allocation8 + $0xa8] sm:$0xff]
    %v453 = vld [vmem:[#allocation8 + $0xb0] sm:$0xff]
    %v454 = vld [vmem:[#allocation8 + $0xb8] sm:$0xff]
    %v455 = vld [vmem:[#allocation8 + $0xc0] sm:$0xff]
    %v456 = vld [vmem:[#allocation8 + $0xc8] sm:$0xff]
    %v457 = vld [vmem:[#allocation8 + $0xd0] sm:$0xff]
    %v458 = vld [vmem:[#allocation8 + $0xd8] sm:$0xff]
    %v459 = vld [vmem:[#allocation8 + $0xe0] sm:$0xff]
    %v460 = vld [vmem:[#allocation8 + $0xe8] sm:$0xff]
    %v461 = vld [vmem:[#allocation8 + $0xf0] sm:$0xff]
    %v462 = vld [vmem:[#allocation8 + $0xf8] sm:$0xff]
    %v463 = vld [vmem:[#allocation8 + $0x100] sm:$0xff]
    %v464 = vld [vmem:[#allocation8 + $0x108] sm:$0xff]
    %v465 = vld [vmem:[#allocation8 + $0x110] sm:$0xff]
    %v466 = vld [vmem:[#allocation8 + $0x118] sm:$0xff]
    %v467 = vld [vmem:[#allocation8 + $0x120] sm:$0xff]
    %v468 = vld [vmem:[#allocation8 + $0x128] sm:$0xff]
    %v469 = vld [vmem:[#allocation8 + $0x130] sm:$0xff]
    %v470 = vld [vmem:[#allocation8 + $0x138] sm:$0xff]
    %v471 = vld [vmem:[#allocation8 + $0x140] sm:$0xff]
    %v472 = vld [vmem:[#allocation8 + $0x148] sm:$0xff]
    %v473 = vld [vmem:[#allocation8 + $0x150] sm:$0xff]
    %v474 = vld [vmem:[#allocation8 + $0x158] sm:$0xff]
    %v475 = vld [vmem:[#allocation8 + $0x160] sm:$0xff]
    %v476 = vld [vmem:[#allocation8 + $0x168] sm:$0xff]
    %v477 = vld [vmem:[#allocation8 + $0x170] sm:$0xff]
    %v478 = vld [vmem:[#allocation8 + $0x178] sm:$0xff]
    %v479 = vld [vmem:[#allocation8 + $0x180] sm:$0xff]
    %v480 = vld [vmem:[#allocation8 + $0x188] sm:$0xff]
    %v481 = vld [vmem:[#allocation8 + $0x190] sm:$0xff]
    %v482 = vld [vmem:[#allocation8 + $0x198] sm:$0xff]
    %v483 = vld [vmem:[#allocation8 + $0x1a0] sm:$0xff]
    %v484 = vld [vmem:[#allocation8 + $0x1a8] sm:$0xff]
    %v485 = vld [vmem:[#allocation8 + $0x1b0] sm:$0xff]
    %v486 = vld [vmem:[#allocation8 + $0x1b8] sm:$0xff]
    %v487 = vld [vmem:[#allocation8 + $0x1c0] sm:$0xff]
    %v488 = vld [vmem:[#allocation8 + $0x1c8] sm:$0xff]
    %v489 = vld [vmem:[#allocation8 + $0x1d0] sm:$0xff]
    %v490 = vld [vmem:[#allocation8 + $0x1d8] sm:$0xff]
    %v491 = vld [vmem:[#allocation8 + $0x1e0] sm:$0xff]
    %v492 = vld [vmem:[#allocation8 + $0x1e8] sm:$0xff]
    %v493 = vld [vmem:[#allocation8 + $0x1f0] sm:$0xff]
    %v494 = vld [vmem:[#allocation8 + $0x1f8] sm:$0xff]
    %s495 = smul.u32 0, 4
    %s496 = smul.addr %s495, 8
    %s497 = scalar_lea.vmem [#allocation2], %s496
    %v498 = vld [vmem:[%s497] sm:$0xff]
    %v499 = vld [vmem:[%s497 + $0x8] sm:$0xff]
    %v500 = vld [vmem:[%s497 + $0x10] sm:$0xff]
    %v501 = vld [vmem:[%s497 + $0x18] sm:$0xff]
    %502 = vmatprep.subr.mxu0 %v432
    %503 = vmatpush1.msra.mxu0 %v431
    %504 = vmatprep.subr.mxu0 %v436
    %505 = vmatpush1.msra.mxu0 %v435
    %506 = vmatprep.subr.mxu0 %v440
    %507 = vmatpush1.msra.mxu0 %v439
    %508 = vmatprep.subr.mxu0 %v444
    %509 = vmatpush1.msra.mxu0 %v443
    %510 = vmatprep.subr.mxu0 %v448
    %511 = vmatpush1.msra.mxu0 %v447
    %512 = vmatprep.subr.mxu0 %v452
    %513 = vmatpush1.msra.mxu0 %v451
    %514 = vmatprep.subr.mxu0 %v456
    %515 = vmatpush1.msra.mxu0 %v455
    %516 = vmatprep.subr.mxu0 %v460
    %517 = vmatpush1.msra.mxu0 %v459
    %518 = vmatprep.subr.mxu0 %v464
    %519 = vmatpush1.msra.mxu0 %v463
    %520 = vmatprep.subr.mxu0 %v468
    %521 = vmatpush1.msra.mxu0 %v467
    %522 = vmatprep.subr.mxu0 %v472
    %523 = vmatpush1.msra.mxu0 %v471
    %524 = vmatprep.subr.mxu0 %v476
    %525 = vmatpush1.msra.mxu0 %v475
    %526 = vmatprep.subr.mxu0 %v480
    %527 = vmatpush1.msra.mxu0 %v479
    %528 = vmatprep.subr.mxu0 %v484
    %529 = vmatpush1.msra.mxu0 %v483
    %530 = vmatprep.subr.mxu0 %v488
    %531 = vmatpush1.msra.mxu0 %v487
    %532 = vmatprep.subr.mxu0 %v492
    %533 = vmatpush1.msra.mxu0 %v491
    %534 = vmatprep.subr.mxu0 0.0
    %535 = vmatpush1.msra.mxu0 0.0
    %536 = vmatprep.subr.mxu0 0.0
    %537 = vmatpush1.msra.mxu0 0.0
    %538 = vmatprep.subr.mxu0 0.0
    %539 = vmatpush1.msra.mxu0 0.0
    %540 = vmatprep.subr.mxu0 0.0
    %541 = vmatpush1.msra.mxu0 0.0
    %542 = vmatprep.subr.mxu0 0.0
    %543 = vmatpush1.msra.mxu0 0.0
    %544 = vmatprep.subr.mxu0 0.0
    %545 = vmatpush1.msra.mxu0 0.0
    %546 = vmatprep.subr.mxu0 0.0
    %547 = vmatpush1.msra.mxu0 0.0
    %548 = vmatprep.subr.mxu0 0.0
    %549 = vmatpush1.msra.mxu0 0.0
    %550 = vmatprep.subr.mxu0 0.0
    %551 = vmatpush1.msra.mxu0 0.0
    %552 = vmatprep.subr.mxu0 0.0
    %553 = vmatpush1.msra.mxu0 0.0
    %554 = vmatprep.subr.mxu0 0.0
    %555 = vmatpush1.msra.mxu0 0.0
    %556 = vmatprep.subr.mxu0 0.0
    %557 = vmatpush1.msra.mxu0 0.0
    %558 = vmatprep.subr.mxu0 0.0
    %559 = vmatpush1.msra.mxu0 0.0
    %560 = vmatprep.subr.mxu0 0.0
    %561 = vmatpush1.msra.mxu0 0.0
    %562 = vmatprep.subr.mxu0 0.0
    %563 = vmatpush1.msra.mxu0 0.0
    %564 = vmatprep.subr.mxu0 0.0
    %565 = vmatpush1.msra.mxu0 0.0
    %566 = vmatprep.mubr.f32.mxu0 0.0
    %567 = vmatmul.mubr.f32.gmra.mrb[0].mxu0 0.0
    %v568 = vpop.f32.mrb[0].mxu0
    %v569 = vadd.f32 0.0, %v568
    %v570 = vpop.f32.mrb[0].mxu0
    %v571 = vadd.f32 0.0, %v570
    %572 = vdwg.mxu0
    %573 = vmatprep.subr.mxu0 %v434
    %574 = vmatpush1.msra.mxu0 %v433
    %575 = vmatprep.subr.mxu0 %v438
    %576 = vmatpush1.msra.mxu0 %v437
    %577 = vmatprep.subr.mxu0 %v442
    %578 = vmatpush1.msra.mxu0 %v441
    %579 = vmatprep.subr.mxu0 %v446
    %580 = vmatpush1.msra.mxu0 %v445
    %581 = vmatprep.subr.mxu0 %v450
    %582 = vmatpush1.msra.mxu0 %v449
    %583 = vmatprep.subr.mxu0 %v454
    %584 = vmatpush1.msra.mxu0 %v453
    %585 = vmatprep.subr.mxu0 %v458
    %586 = vmatpush1.msra.mxu0 %v457
    %587 = vmatprep.subr.mxu0 %v462
    %588 = vmatpush1.msra.mxu0 %v461
    %589 = vmatprep.subr.mxu0 %v466
    %590 = vmatpush1.msra.mxu0 %v465
    %591 = vmatprep.subr.mxu0 %v470
    %592 = vmatpush1.msra.mxu0 %v469
    %593 = vmatprep.subr.mxu0 %v474
    %594 = vmatpush1.msra.mxu0 %v473
    %595 = vmatprep.subr.mxu0 %v478
    %596 = vmatpush1.msra.mxu0 %v477
    %597 = vmatprep.subr.mxu0 %v482
    %598 = vmatpush1.msra.mxu0 %v481
    %599 = vmatprep.subr.mxu0 %v486
    %600 = vmatpush1.msra.mxu0 %v485
    %601 = vmatprep.subr.mxu0 %v490
    %602 = vmatpush1.msra.mxu0 %v489
    %603 = vmatprep.subr.mxu0 %v494
    %604 = vmatpush1.msra.mxu0 %v493
    %605 = vmatprep.subr.mxu0 0.0
    %606 = vmatpush1.msra.mxu0 0.0
    %607 = vmatprep.subr.mxu0 0.0
    %608 = vmatpush1.msra.mxu0 0.0
    %609 = vmatprep.subr.mxu0 0.0
    %610 = vmatpush1.msra.mxu0 0.0
    %611 = vmatprep.subr.mxu0 0.0
    %612 = vmatpush1.msra.mxu0 0.0
    %613 = vmatprep.subr.mxu0 0.0
    %614 = vmatpush1.msra.mxu0 0.0
    %615 = vmatprep.subr.mxu0 0.0
    %616 = vmatpush1.msra.mxu0 0.0
    %617 = vmatprep.subr.mxu0 0.0
    %618 = vmatpush1.msra.mxu0 0.0
    %619 = vmatprep.subr.mxu0 0.0
    %620 = vmatpush1.msra.mxu0 0.0
    %621 = vmatprep.subr.mxu0 0.0
    %622 = vmatpush1.msra.mxu0 0.0
    %623 = vmatprep.subr.mxu0 0.0
    %624 = vmatpush1.msra.mxu0 0.0
    %625 = vmatprep.subr.mxu0 0.0
    %626 = vmatpush1.msra.mxu0 0.0
    %627 = vmatprep.subr.mxu0 0.0
    %628 = vmatpush1.msra.mxu0 0.0
    %629 = vmatprep.subr.mxu0 0.0
    %630 = vmatpush1.msra.mxu0 0.0
    %631 = vmatprep.subr.mxu0 0.0
    %632 = vmatpush1.msra.mxu0 0.0
    %633 = vmatprep.subr.mxu0 0.0
    %634 = vmatpush1.msra.mxu0 0.0
    %635 = vmatprep.subr.mxu0 0.0
    %636 = vmatpush1.msra.mxu0 0.0
    %637 = vmatprep.mubr.f32.mxu0 0.0
    %638 = vmatmul.mubr.f32.gmra.mrb[0].mxu0 0.0
    %v639 = vpop.f32.mrb[0].mxu0
    %v640 = vadd.f32 0.0, %v639
    %v641 = vpop.f32.mrb[0].mxu0
    %v642 = vadd.f32 0.0, %v641
    %643 = vdwg.mxu0
    %v644 = vadd.f32 %v498, %v569
    %v645 = vadd.f32 %v499, %v571
    %v646 = vadd.f32 %v500, %v640
    %v647 = vadd.f32 %v501, %v642
    %v648 = vxor.u32 %v644, 2147483648
    %v649 = vxor.u32 %v645, 2147483648
    %v650 = vxor.u32 %v646, 2147483648
    %v651 = vmul.f32 %v648, 1.442695
    %v652 = vpow.pop %v651
    %v653 = vmul.f32 %v649, 1.442695
    %v654 = vpow.pop %v653
    %v655 = vmul.f32 %v650, 1.442695
    %v656 = vpow.pop %v655
    %v657 = vadd.f32 %v652, 1.0
    %v658 = vadd.f32 %v654, 1.0
    %v659 = vadd.f32 %v656, 1.0
    %v660 = vrcp.pop %v657
    %v661 = vmul.f32 1.0, %v660
    %v662 = vrcp.pop %v658
    %v663 = vmul.f32 1.0, %v662
    %v664 = vrcp.pop %v659
    %v665 = vmul.f32 1.0, %v664
    %v666 = vtanh.pop %v647
    %v667 = vmul.f32 %v663, 0.0
    %v668 = vmul.f32 %v661, %v666
    %v669 = vadd.f32 %v667, %v668
    %v670 = vtanh.pop %v669
    %v671 = vmul.f32 %v665, %v670
    %s672 = smul.u32 1, 4
    %s673 = smul.addr %s672, 8
    %s674 = scalar_lea.vmem [#allocation2], %s673
    %v675 = vld [vmem:[%s674] sm:$0xff]
    %v676 = vld [vmem:[%s674 + $0x8] sm:$0xff]
    %v677 = vld [vmem:[%s674 + $0x10] sm:$0xff]
    %v678 = vld [vmem:[%s674 + $0x18] sm:$0xff]
    %679 = vmatprep.subr.mxu0 %v432
    %680 = vmatpush1.msra.mxu0 %v431
    %681 = vmatprep.subr.mxu0 %v436
    %682 = vmatpush1.msra.mxu0 %v435
    %683 = vmatprep.subr.mxu0 %v440
    %684 = vmatpush1.msra.mxu0 %v439
    %685 = vmatprep.subr.mxu0 %v444
    %686 = vmatpush1.msra.mxu0 %v443
    %687 = vmatprep.subr.mxu0 %v448
    %688 = vmatpush1.msra.mxu0 %v447
    %689 = vmatprep.subr.mxu0 %v452
    %690 = vmatpush1.msra.mxu0 %v451
    %691 = vmatprep.subr.mxu0 %v456
    %692 = vmatpush1.msra.mxu0 %v455
    %693 = vmatprep.subr.mxu0 %v460
    %694 = vmatpush1.msra.mxu0 %v459
    %695 = vmatprep.subr.mxu0 %v464
    %696 = vmatpush1.msra.mxu0 %v463
    %697 = vmatprep.subr.mxu0 %v468
    %698 = vmatpush1.msra.mxu0 %v467
    %699 = vmatprep.subr.mxu0 %v472
    %700 = vmatpush1.msra.mxu0 %v471
    %701 = vmatprep.subr.mxu0 %v476
    %702 = vmatpush1.msra.mxu0 %v475
    %703 = vmatprep.subr.mxu0 %v480
    %704 = vmatpush1.msra.mxu0 %v479
    %705 = vmatprep.subr.mxu0 %v484
    %706 = vmatpush1.msra.mxu0 %v483
    %707 = vmatprep.subr.mxu0 %v488
    %708 = vmatpush1.msra.mxu0 %v487
    %709 = vmatprep.subr.mxu0 %v492
    %710 = vmatpush1.msra.mxu0 %v491
    %711 = vmatprep.subr.mxu0 0.0
    %712 = vmatpush1.msra.mxu0 0.0
    %713 = vmatprep.subr.mxu0 0.0
    %714 = vmatpush1.msra.mxu0 0.0
    %715 = vmatprep.subr.mxu0 0.0
    %716 = vmatpush1.msra.mxu0 0.0
    %717 = vmatprep.subr.mxu0 0.0
    %718 = vmatpush1.msra.mxu0 0.0
    %719 = vmatprep.subr.mxu0 0.0
    %720 = vmatpush1.msra.mxu0 0.0
    %721 = vmatprep.subr.mxu0 0.0
    %722 = vmatpush1.msra.mxu0 0.0
    %723 = vmatprep.subr.mxu0 0.0
    %724 = vmatpush1.msra.mxu0 0.0
    %725 = vmatprep.subr.mxu0 0.0
    %726 = vmatpush1.msra.mxu0 0.0
    %727 = vmatprep.subr.mxu0 0.0
    %728 = vmatpush1.msra.mxu0 0.0
    %729 = vmatprep.subr.mxu0 0.0
    %730 = vmatpush1.msra.mxu0 0.0
    %731 = vmatprep.subr.mxu0 0.0
    %732 = vmatpush1.msra.mxu0 0.0
    %733 = vmatprep.subr.mxu0 0.0
    %734 = vmatpush1.msra.mxu0 0.0
    %735 = vmatprep.subr.mxu0 0.0
    %736 = vmatpush1.msra.mxu0 0.0
    %737 = vmatprep.subr.mxu0 0.0
    %738 = vmatpush1.msra.mxu0 0.0
    %739 = vmatprep.subr.mxu0 0.0
    %740 = vmatpush1.msra.mxu0 0.0
    %741 = vmatprep.subr.mxu0 0.0
    %742 = vmatpush1.msra.mxu0 0.0
    %743 = vmatprep.mubr.f32.mxu0 0.0
    %744 = vmatmul.mubr.f32.gmra.mrb[0].mxu0 %v671
    %v745 = vpop.f32.mrb[0].mxu0
    %v746 = vadd.f32 0.0, %v745
    %v747 = vpop.f32.mrb[0].mxu0
    %v748 = vadd.f32 0.0, %v747
    %749 = vdwg.mxu0
    %750 = vmatprep.subr.mxu0 %v434
    %751 = vmatpush1.msra.mxu0 %v433
    %752 = vmatprep.subr.mxu0 %v438
    %753 = vmatpush1.msra.mxu0 %v437
    %754 = vmatprep.subr.mxu0 %v442
    %755 = vmatpush1.msra.mxu0 %v441
    %756 = vmatprep.subr.mxu0 %v446
    %757 = vmatpush1.msra.mxu0 %v445
    %758 = vmatprep.subr.mxu0 %v450
    %759 = vmatpush1.msra.mxu0 %v449
    %760 = vmatprep.subr.mxu0 %v454
    %761 = vmatpush1.msra.mxu0 %v453
    %762 = vmatprep.subr.mxu0 %v458
    %763 = vmatpush1.msra.mxu0 %v457
    %764 = vmatprep.subr.mxu0 %v462
    %765 = vmatpush1.msra.mxu0 %v461
    %766 = vmatprep.subr.mxu0 %v466
    %767 = vmatpush1.msra.mxu0 %v465
    %768 = vmatprep.subr.mxu0 %v470
    %769 = vmatpush1.msra.mxu0 %v469
    %770 = vmatprep.subr.mxu0 %v474
    %771 = vmatpush1.msra.mxu0 %v473
    %772 = vmatprep.subr.mxu0 %v478
    %773 = vmatpush1.msra.mxu0 %v477
    %774 = vmatprep.subr.mxu0 %v482
    %775 = vmatpush1.msra.mxu0 %v481
    %776 = vmatprep.subr.mxu0 %v486
    %777 = vmatpush1.msra.mxu0 %v485
    %778 = vmatprep.subr.mxu0 %v490
    %779 = vmatpush1.msra.mxu0 %v489
    %780 = vmatprep.subr.mxu0 %v494
    %781 = vmatpush1.msra.mxu0 %v493
    %782 = vmatprep.subr.mxu0 0.0
    %783 = vmatpush1.msra.mxu0 0.0
    %784 = vmatprep.subr.mxu0 0.0
    %785 = vmatpush1.msra.mxu0 0.0
    %786 = vmatprep.subr.mxu0 0.0
    %787 = vmatpush1.msra.mxu0 0.0
    %788 = vmatprep.subr.mxu0 0.0
    %789 = vmatpush1.msra.mxu0 0.0
    %790 = vmatprep.subr.mxu0 0.0
    %791 = vmatpush1.msra.mxu0 0.0
    %792 = vmatprep.subr.mxu0 0.0
    %793 = vmatpush1.msra.mxu0 0.0
    %794 = vmatprep.subr.mxu0 0.0
    %795 = vmatpush1.msra.mxu0 0.0
    %796 = vmatprep.subr.mxu0 0.0
    %797 = vmatpush1.msra.mxu0 0.0
    %798 = vmatprep.subr.mxu0 0.0
    %799 = vmatpush1.msra.mxu0 0.0
    %800 = vmatprep.subr.mxu0 0.0
    %801 = vmatpush1.msra.mxu0 0.0
    %802 = vmatprep.subr.mxu0 0.0
    %803 = vmatpush1.msra.mxu0 0.0
    %804 = vmatprep.subr.mxu0 0.0
    %805 = vmatpush1.msra.mxu0 0.0
    %806 = vmatprep.subr.mxu0 0.0
    %807 = vmatpush1.msra.mxu0 0.0
    %808 = vmatprep.subr.mxu0 0.0
    %809 = vmatpush1.msra.mxu0 0.0
    %810 = vmatprep.subr.mxu0 0.0
    %811 = vmatpush1.msra.mxu0 0.0
    %812 = vmatprep.subr.mxu0 0.0
    %813 = vmatpush1.msra.mxu0 0.0
    %814 = vmatprep.mubr.f32.mxu0 0.0
    %815 = vmatmul.mubr.f32.gmra.mrb[0].mxu0 %v671
    %v816 = vpop.f32.mrb[0].mxu0
    %v817 = vadd.f32 0.0, %v816
    %v818 = vpop.f32.mrb[0].mxu0
    %v819 = vadd.f32 0.0, %v818
    %820 = vdwg.mxu0
    %v821 = vadd.f32 %v675, %v746
    %v822 = vadd.f32 %v676, %v748
    %v823 = vadd.f32 %v677, %v817
    %v824 = vadd.f32 %v678, %v819
    %v825 = vxor.u32 %v821, 2147483648
    %v826 = vxor.u32 %v822, 2147483648
    %v827 = vxor.u32 %v823, 2147483648
    %v828 = vmul.f32 %v825, 1.442695
    %v829 = vpow.pop %v828
    %v830 = vmul.f32 %v826, 1.442695
    %v831 = vpow.pop %v830
    %v832 = vmul.f32 %v827, 1.442695
    %v833 = vpow.pop %v832
    %v834 = vadd.f32 %v829, 1.0
    %v835 = vadd.f32 %v831, 1.0
    %v836 = vadd.f32 %v833, 1.0
    %v837 = vrcp.pop %v834
    %v838 = vmul.f32 1.0, %v837
    %v839 = vrcp.pop %v835
    %v840 = vmul.f32 1.0, %v839
    %v841 = vrcp.pop %v836
    %v842 = vmul.f32 1.0, %v841
    %v843 = vtanh.pop %v824
    %v844 = vmul.f32 %v840, %v669
    %v845 = vmul.f32 %v838, %v843
    %v846 = vadd.f32 %v844, %v845
    %v847 = vtanh.pop %v846
    %v848 = vmul.f32 %v842, %v847
    %s849 = smul.u32 2, 4
    %s850 = smul.addr %s849, 8
    %s851 = scalar_lea.vmem [#allocation2], %s850
    %v852 = vld [vmem:[%s851] sm:$0xff]
    %v853 = vld [vmem:[%s851 + $0x8] sm:$0xff]
    %v854 = vld [vmem:[%s851 + $0x10] sm:$0xff]
    %v855 = vld [vmem:[%s851 + $0x18] sm:$0xff]
    %856 = vmatprep.subr.mxu0 %v432
    %857 = vmatpush1.msra.mxu0 %v431
    %858 = vmatprep.subr.mxu0 %v436
    %859 = vmatpush1.msra.mxu0 %v435
    %860 = vmatprep.subr.mxu0 %v440
    %861 = vmatpush1.msra.mxu0 %v439
    %862 = vmatprep.subr.mxu0 %v444
    %863 = vmatpush1.msra.mxu0 %v443
    %864 = vmatprep.subr.mxu0 %v448
    %865 = vmatpush1.msra.mxu0 %v447
    %866 = vmatprep.subr.mxu0 %v452
    %867 = vmatpush1.msra.mxu0 %v451
    %868 = vmatprep.subr.mxu0 %v456
    %869 = vmatpush1.msra.mxu0 %v455
    %870 = vmatprep.subr.mxu0 %v460
    %871 = vmatpush1.msra.mxu0 %v459
    %872 = vmatprep.subr.mxu0 %v464
    %873 = vmatpush1.msra.mxu0 %v463
    %874 = vmatprep.subr.mxu0 %v468
    %875 = vmatpush1.msra.mxu0 %v467
    %876 = vmatprep.subr.mxu0 %v472
    %877 = vmatpush1.msra.mxu0 %v471
    %878 = vmatprep.subr.mxu0 %v476
    %879 = vmatpush1.msra.mxu0 %v475
    %880 = vmatprep.subr.mxu0 %v480
    %881 = vmatpush1.msra.mxu0 %v479
    %882 = vmatprep.subr.mxu0 %v484
    %883 = vmatpush1.msra.mxu0 %v483
    %884 = vmatprep.subr.mxu0 %v488
    %885 = vmatpush1.msra.mxu0 %v487
    %886 = vmatprep.subr.mxu0 %v492
    %887 = vmatpush1.msra.mxu0 %v491
    %888 = vmatprep.subr.mxu0 0.0
    %889 = vmatpush1.msra.mxu0 0.0
    %890 = vmatprep.subr.mxu0 0.0
    %891 = vmatpush1.msra.mxu0 0.0
    %892 = vmatprep.subr.mxu0 0.0
    %893 = vmatpush1.msra.mxu0 0.0
    %894 = vmatprep.subr.mxu0 0.0
    %895 = vmatpush1.msra.mxu0 0.0
    %896 = vmatprep.subr.mxu0 0.0
    %897 = vmatpush1.msra.mxu0 0.0
    %898 = vmatprep.subr.mxu0 0.0
    %899 = vmatpush1.msra.mxu0 0.0
    %900 = vmatprep.subr.mxu0 0.0
    %901 = vmatpush1.msra.mxu0 0.0
    %902 = vmatprep.subr.mxu0 0.0
    %903 = vmatpush1.msra.mxu0 0.0
    %904 = vmatprep.subr.mxu0 0.0
    %905 = vmatpush1.msra.mxu0 0.0
    %906 = vmatprep.subr.mxu0 0.0
    %907 = vmatpush1.msra.mxu0 0.0
    %908 = vmatprep.subr.mxu0 0.0
    %909 = vmatpush1.msra.mxu0 0.0
    %910 = vmatprep.subr.mxu0 0.0
    %911 = vmatpush1.msra.mxu0 0.0
    %912 = vmatprep.subr.mxu0 0.0
    %913 = vmatpush1.msra.mxu0 0.0
    %914 = vmatprep.subr.mxu0 0.0
    %915 = vmatpush1.msra.mxu0 0.0
    %916 = vmatprep.subr.mxu0 0.0
    %917 = vmatpush1.msra.mxu0 0.0
    %918 = vmatprep.subr.mxu0 0.0
    %919 = vmatpush1.msra.mxu0 0.0
    %920 = vmatprep.mubr.f32.mxu0 0.0
    %921 = vmatmul.mubr.f32.gmra.mrb[0].mxu0 %v848
    %v922 = vpop.f32.mrb[0].mxu0
    %v923 = vadd.f32 0.0, %v922
    %v924 = vpop.f32.mrb[0].mxu0
    %v925 = vadd.f32 0.0, %v924
    %926 = vdwg.mxu0
    %927 = vmatprep.subr.mxu0 %v434
    %928 = vmatpush1.msra.mxu0 %v433
    %929 = vmatprep.subr.mxu0 %v438
    %930 = vmatpush1.msra.mxu0 %v437
    %931 = vmatprep.subr.mxu0 %v442
    %932 = vmatpush1.msra.mxu0 %v441
    %933 = vmatprep.subr.mxu0 %v446
    %934 = vmatpush1.msra.mxu0 %v445
    %935 = vmatprep.subr.mxu0 %v450
    %936 = vmatpush1.msra.mxu0 %v449
    %937 = vmatprep.subr.mxu0 %v454
    %938 = vmatpush1.msra.mxu0 %v453
    %939 = vmatprep.subr.mxu0 %v458
    %940 = vmatpush1.msra.mxu0 %v457
    %941 = vmatprep.subr.mxu0 %v462
    %942 = vmatpush1.msra.mxu0 %v461
    %943 = vmatprep.subr.mxu0 %v466
    %944 = vmatpush1.msra.mxu0 %v465
    %945 = vmatprep.subr.mxu0 %v470
    %946 = vmatpush1.msra.mxu0 %v469
    %947 = vmatprep.subr.mxu0 %v474
    %948 = vmatpush1.msra.mxu0 %v473
    %949 = vmatprep.subr.mxu0 %v478
    %950 = vmatpush1.msra.mxu0 %v477
    %951 = vmatprep.subr.mxu0 %v482
    %952 = vmatpush1.msra.mxu0 %v481
    %953 = vmatprep.subr.mxu0 %v486
    %954 = vmatpush1.msra.mxu0 %v485
    %955 = vmatprep.subr.mxu0 %v490
    %956 = vmatpush1.msra.mxu0 %v489
    %957 = vmatprep.subr.mxu0 %v494
    %958 = vmatpush1.msra.mxu0 %v493
    %959 = vmatprep.subr.mxu0 0.0
    %960 = vmatpush1.msra.mxu0 0.0
    %961 = vmatprep.subr.mxu0 0.0
    %962 = vmatpush1.msra.mxu0 0.0
    %963 = vmatprep.subr.mxu0 0.0
    %964 = vmatpush1.msra.mxu0 0.0
    %965 = vmatprep.subr.mxu0 0.0
    %966 = vmatpush1.msra.mxu0 0.0
    %967 = vmatprep.subr.mxu0 0.0
    %968 = vmatpush1.msra.mxu0 0.0
    %969 = vmatprep.subr.mxu0 0.0
    %970 = vmatpush1.msra.mxu0 0.0
    %971 = vmatprep.subr.mxu0 0.0
    %972 = vmatpush1.msra.mxu0 0.0
    %973 = vmatprep.subr.mxu0 0.0
    %974 = vmatpush1.msra.mxu0 0.0
    %975 = vmatprep.subr.mxu0 0.0
    %976 = vmatpush1.msra.mxu0 0.0
    %977 = vmatprep.subr.mxu0 0.0
    %978 = vmatpush1.msra.mxu0 0.0
    %979 = vmatprep.subr.mxu0 0.0
    %980 = vmatpush1.msra.mxu0 0.0
    %981 = vmatprep.subr.mxu0 0.0
    %982 = vmatpush1.msra.mxu0 0.0
    %983 = vmatprep.subr.mxu0 0.0
    %984 = vmatpush1.msra.mxu0 0.0
    %985 = vmatprep.subr.mxu0 0.0
    %986 = vmatpush1.msra.mxu0 0.0
    %987 = vmatprep.subr.mxu0 0.0
    %988 = vmatpush1.msra.mxu0 0.0
    %989 = vmatprep.subr.mxu0 0.0
    %990 = vmatpush1.msra.mxu0 0.0
    %991 = vmatprep.mubr.f32.mxu0 0.0
    %992 = vmatmul.mubr.f32.gmra.mrb[0].mxu0 %v848
    %v993 = vpop.f32.mrb[0].mxu0
    %v994 = vadd.f32 0.0, %v993
    %v995 = vpop.f32.mrb[0].mxu0
    %v996 = vadd.f32 0.0, %v995
    %997 = vdwg.mxu0
    %v998 = vadd.f32 %v852, %v923
    %v999 = vadd.f32 %v853, %v925
    %v1000 = vadd.f32 %v854, %v994
    %v1001 = vadd.f32 %v855, %v996
    %v1002 = vxor.u32 %v998, 2147483648
    %v1003 = vxor.u32 %v999, 2147483648
    %v1004 = vxor.u32 %v1000, 2147483648
    %v1005 = vmul.f32 %v1002, 1.442695
    %v1006 = vpow.pop %v1005
    %v1007 = vmul.f32 %v1003, 1.442695
    %v1008 = vpow.pop %v1007
    %v1009 = vmul.f32 %v1004, 1.442695
    %v1010 = vpow.pop %v1009
    %v1011 = vadd.f32 %v1006, 1.0
    %v1012 = vadd.f32 %v1008, 1.0
    %v1013 = vadd.f32 %v1010, 1.0
    %v1014 = vrcp.pop %v1011
    %v1015 = vmul.f32 1.0, %v1014
    %v1016 = vrcp.pop %v1012
    %v1017 = vmul.f32 1.0, %v1016
    %v1018 = vrcp.pop %v1013
    %v1019 = vmul.f32 1.0, %v1018
    %v1020 = vtanh.pop %v1001
    %v1021 = vmul.f32 %v1017, %v846
    %v1022 = vmul.f32 %v1015, %v1020
    %v1023 = vadd.f32 %v1021, %v1022
    %v1024 = vtanh.pop %v1023
    %v1025 = vmul.f32 %v1019, %v1024
    %s1026 = smul.u32 3, 4
    %s1027 = smul.addr %s1026, 8
    %s1028 = scalar_lea.vmem [#allocation2], %s1027
    %v1029 = vld [vmem:[%s1028] sm:$0xff]
    %v1030 = vld [vmem:[%s1028 + $0x8] sm:$0xff]
    %v1031 = vld [vmem:[%s1028 + $0x10] sm:$0xff]
    %v1032 = vld [vmem:[%s1028 + $0x18] sm:$0xff]
    %1033 = vmatprep.subr.mxu0 %v432
    %1034 = vmatpush1.msra.mxu0 %v431
    %1035 = vmatprep.subr.mxu0 %v436
    %1036 = vmatpush1.msra.mxu0 %v435
    %1037 = vmatprep.subr.mxu0 %v440
    %1038 = vmatpush1.msra.mxu0 %v439
    %1039 = vmatprep.subr.mxu0 %v444
    %1040 = vmatpush1.msra.mxu0 %v443
    %1041 = vmatprep.subr.mxu0 %v448
    %1042 = vmatpush1.msra.mxu0 %v447
    %1043 = vmatprep.subr.mxu0 %v452
    %1044 = vmatpush1.msra.mxu0 %v451
    %1045 = vmatprep.subr.mxu0 %v456
    %1046 = vmatpush1.msra.mxu0 %v455
    %1047 = vmatprep.subr.mxu0 %v460
    %1048 = vmatpush1.msra.mxu0 %v459
    %1049 = vmatprep.subr.mxu0 %v464
    %1050 = vmatpush1.msra.mxu0 %v463
    %1051 = vmatprep.subr.mxu0 %v468
    %1052 = vmatpush1.msra.mxu0 %v467
    %1053 = vmatprep.subr.mxu0 %v472
    %1054 = vmatpush1.msra.mxu0 %v471
    %1055 = vmatprep.subr.mxu0 %v476
    %1056 = vmatpush1.msra.mxu0 %v475
    %1057 = vmatprep.subr.mxu0 %v480
    %1058 = vmatpush1.msra.mxu0 %v479
    %1059 = vmatprep.subr.mxu0 %v484
    %1060 = vmatpush1.msra.mxu0 %v483
    %1061 = vmatprep.subr.mxu0 %v488
    %1062 = vmatpush1.msra.mxu0 %v487
    %1063 = vmatprep.subr.mxu0 %v492
    %1064 = vmatpush1.msra.mxu0 %v491
    %1065 = vmatprep.subr.mxu0 0.0
    %1066 = vmatpush1.msra.mxu0 0.0
    %1067 = vmatprep.subr.mxu0 0.0
    %1068 = vmatpush1.msra.mxu0 0.0
    %1069 = vmatprep.subr.mxu0 0.0
    %1070 = vmatpush1.msra.mxu0 0.0
    %1071 = vmatprep.subr.mxu0 0.0
    %1072 = vmatpush1.msra.mxu0 0.0
    %1073 = vmatprep.subr.mxu0 0.0
    %1074 = vmatpush1.msra.mxu0 0.0
    %1075 = vmatprep.subr.mxu0 0.0
    %1076 = vmatpush1.msra.mxu0 0.0
    %1077 = vmatprep.subr.mxu0 0.0
    %1078 = vmatpush1.msra.mxu0 0.0
    %1079 = vmatprep.subr.mxu0 0.0
    %1080 = vmatpush1.msra.mxu0 0.0
    %1081 = vmatprep.subr.mxu0 0.0
    %1082 = vmatpush1.msra.mxu0 0.0
    %1083 = vmatprep.subr.mxu0 0.0
    %1084 = vmatpush1.msra.mxu0 0.0
    %1085 = vmatprep.subr.mxu0 0.0
    %1086 = vmatpush1.msra.mxu0 0.0
    %1087 = vmatprep.subr.mxu0 0.0
    %1088 = vmatpush1.msra.mxu0 0.0
    %1089 = vmatprep.subr.mxu0 0.0
    %1090 = vmatpush1.msra.mxu0 0.0
    %1091 = vmatprep.subr.mxu0 0.0
    %1092 = vmatpush1.msra.mxu0 0.0
    %1093 = vmatprep.subr.mxu0 0.0
    %1094 = vmatpush1.msra.mxu0 0.0
    %1095 = vmatprep.subr.mxu0 0.0
    %1096 = vmatpush1.msra.mxu0 0.0
    %1097 = vmatprep.mubr.f32.mxu0 0.0
    %1098 = vmatmul.mubr.f32.gmra.mrb[0].mxu0 %v1025
    %v1099 = vpop.f32.mrb[0].mxu0
    %v1100 = vadd.f32 0.0, %v1099
    %v1101 = vpop.f32.mrb[0].mxu0
    %v1102 = vadd.f32 0.0, %v1101
    %1103 = vdwg.mxu0
    %1104 = vmatprep.subr.mxu0 %v434
    %1105 = vmatpush1.msra.mxu0 %v433
    %1106 = vmatprep.subr.mxu0 %v438
    %1107 = vmatpush1.msra.mxu0 %v437
    %1108 = vmatprep.subr.mxu0 %v442
    %1109 = vmatpush1.msra.mxu0 %v441
    %1110 = vmatprep.subr.mxu0 %v446
    %1111 = vmatpush1.msra.mxu0 %v445
    %1112 = vmatprep.subr.mxu0 %v450
    %1113 = vmatpush1.msra.mxu0 %v449
    %1114 = vmatprep.subr.mxu0 %v454
    %1115 = vmatpush1.msra.mxu0 %v453
    %1116 = vmatprep.subr.mxu0 %v458
    %1117 = vmatpush1.msra.mxu0 %v457
    %1118 = vmatprep.subr.mxu0 %v462
    %1119 = vmatpush1.msra.mxu0 %v461
    %1120 = vmatprep.subr.mxu0 %v466
    %1121 = vmatpush1.msra.mxu0 %v465
    %1122 = vmatprep.subr.mxu0 %v470
    %1123 = vmatpush1.msra.mxu0 %v469
    %1124 = vmatprep.subr.mxu0 %v474
    %1125 = vmatpush1.msra.mxu0 %v473
    %1126 = vmatprep.subr.mxu0 %v478
    %1127 = vmatpush1.msra.mxu0 %v477
    %1128 = vmatprep.subr.mxu0 %v482
    %1129 = vmatpush1.msra.mxu0 %v481
    %1130 = vmatprep.subr.mxu0 %v486
    %1131 = vmatpush1.msra.mxu0 %v485
    %1132 = vmatprep.subr.mxu0 %v490
    %1133 = vmatpush1.msra.mxu0 %v489
    %1134 = vmatprep.subr.mxu0 %v494
    %1135 = vmatpush1.msra.mxu0 %v493
    %1136 = vmatprep.subr.mxu0 0.0
    %1137 = vmatpush1.msra.mxu0 0.0
    %1138 = vmatprep.subr.mxu0 0.0
    %1139 = vmatpush1.msra.mxu0 0.0
    %1140 = vmatprep.subr.mxu0 0.0
    %1141 = vmatpush1.msra.mxu0 0.0
    %1142 = vmatprep.subr.mxu0 0.0
    %1143 = vmatpush1.msra.mxu0 0.0
    %1144 = vmatprep.subr.mxu0 0.0
    %1145 = vmatpush1.msra.mxu0 0.0
    %1146 = vmatprep.subr.mxu0 0.0
    %1147 = vmatpush1.msra.mxu0 0.0
    %1148 = vmatprep.subr.mxu0 0.0
    %1149 = vmatpush1.msra.mxu0 0.0
    %1150 = vmatprep.subr.mxu0 0.0
    %1151 = vmatpush1.msra.mxu0 0.0
    %1152 = vmatprep.subr.mxu0 0.0
    %1153 = vmatpush1.msra.mxu0 0.0
    %1154 = vmatprep.subr.mxu0 0.0
    %1155 = vmatpush1.msra.mxu0 0.0
    %1156 = vmatprep.subr.mxu0 0.0
    %1157 = vmatpush1.msra.mxu0 0.0
    %1158 = vmatprep.subr.mxu0 0.0
    %1159 = vmatpush1.msra.mxu0 0.0
    %1160 = vmatprep.subr.mxu0 0.0
    %1161 = vmatpush1.msra.mxu0 0.0
    %1162 = vmatprep.subr.mxu0 0.0
    %1163 = vmatpush1.msra.mxu0 0.0
    %1164 = vmatprep.subr.mxu0 0.0
    %1165 = vmatpush1.msra.mxu0 0.0
    %1166 = vmatprep.subr.mxu0 0.0
    %1167 = vmatpush1.msra.mxu0 0.0
    %1168 = vmatprep.mubr.f32.mxu0 0.0
    %1169 = vmatmul.mubr.f32.gmra.mrb[0].mxu0 %v1025
    %v1170 = vpop.f32.mrb[0].mxu0
    %v1171 = vadd.f32 0.0, %v1170
    %v1172 = vpop.f32.mrb[0].mxu0
    %v1173 = vadd.f32 0.0, %v1172
    %1174 = vdwg.mxu0
    %v1175 = vadd.f32 %v1029, %v1100
    %v1176 = vadd.f32 %v1030, %v1102
    %v1177 = vadd.f32 %v1031, %v1171
    %v1178 = vadd.f32 %v1032, %v1173
    %v1179 = vxor.u32 %v1175, 2147483648
    %v1180 = vxor.u32 %v1176, 2147483648
    %v1181 = vxor.u32 %v1177, 2147483648
    %v1182 = vmul.f32 %v1179, 1.442695
    %v1183 = vpow.pop %v1182
    %v1184 = vmul.f32 %v1180, 1.442695
    %v1185 = vpow.pop %v1184
    %v1186 = vmul.f32 %v1181, 1.442695
    %v1187 = vpow.pop %v1186
    %v1188 = vadd.f32 %v1183, 1.0
    %v1189 = vadd.f32 %v1185, 1.0
    %v1190 = vadd.f32 %v1187, 1.0
    %v1191 = vrcp.pop %v1188
    %v1192 = vmul.f32 1.0, %v1191
    %v1193 = vrcp.pop %v1189
    %v1194 = vmul.f32 1.0, %v1193
    %v1195 = vrcp.pop %v1190
    %v1196 = vmul.f32 1.0, %v1195
    %v1197 = vtanh.pop %v1178
    %v1198 = vmul.f32 %v1194, %v1023
    %v1199 = vmul.f32 %v1192, %v1197
    %v1200 = vadd.f32 %v1198, %v1199
    %v1201 = vtanh.pop %v1200
    %v1202 = vmul.f32 %v1196, %v1201
    %s1203 = smul.u32 4, 4
    %s1204 = smul.addr %s1203, 8
    %s1205 = scalar_lea.vmem [#allocation2], %s1204
    %v1206 = vld [vmem:[%s1205] sm:$0xff]
    %v1207 = vld [vmem:[%s1205 + $0x8] sm:$0xff]
    %v1208 = vld [vmem:[%s1205 + $0x10] sm:$0xff]
    %v1209 = vld [vmem:[%s1205 + $0x18] sm:$0xff]
    %1210 = vmatprep.subr.mxu0 %v432
    %1211 = vmatpush1.msra.mxu0 %v431
    %1212 = vmatprep.subr.mxu0 %v436
    %1213 = vmatpush1.msra.mxu0 %v435
    %1214 = vmatprep.subr.mxu0 %v440
    %1215 = vmatpush1.msra.mxu0 %v439
    %1216 = vmatprep.subr.mxu0 %v444
    %1217 = vmatpush1.msra.mxu0 %v443
    %1218 = vmatprep.subr.mxu0 %v448
    %1219 = vmatpush1.msra.mxu0 %v447
    %1220 = vmatprep.subr.mxu0 %v452
    %1221 = vmatpush1.msra.mxu0 %v451
    %1222 = vmatprep.subr.mxu0 %v456
    %1223 = vmatpush1.msra.mxu0 %v455
    %1224 = vmatprep.subr.mxu0 %v460
    %1225 = vmatpush1.msra.mxu0 %v459
    %1226 = vmatprep.subr.mxu0 %v464
    %1227 = vmatpush1.msra.mxu0 %v463
    %1228 = vmatprep.subr.mxu0 %v468
    %1229 = vmatpush1.msra.mxu0 %v467
    %1230 = vmatprep.subr.mxu0 %v472
    %1231 = vmatpush1.msra.mxu0 %v471
    %1232 = vmatprep.subr.mxu0 %v476
    %1233 = vmatpush1.msra.mxu0 %v475
    %1234 = vmatprep.subr.mxu0 %v480
    %1235 = vmatpush1.msra.mxu0 %v479
    %1236 = vmatprep.subr.mxu0 %v484
    %1237 = vmatpush1.msra.mxu0 %v483
    %1238 = vmatprep.subr.mxu0 %v488
    %1239 = vmatpush1.msra.mxu0 %v487
    %1240 = vmatprep.subr.mxu0 %v492
    %1241 = vmatpush1.msra.mxu0 %v491
    %1242 = vmatprep.subr.mxu0 0.0
    %1243 = vmatpush1.msra.mxu0 0.0
    %1244 = vmatprep.subr.mxu0 0.0
    %1245 = vmatpush1.msra.mxu0 0.0
    %1246 = vmatprep.subr.mxu0 0.0
    %1247 = vmatpush1.msra.mxu0 0.0
    %1248 = vmatprep.subr.mxu0 0.0
    %1249 = vmatpush1.msra.mxu0 0.0
    %1250 = vmatprep.subr.mxu0 0.0
    %1251 = vmatpush1.msra.mxu0 0.0
    %1252 = vmatprep.subr.mxu0 0.0
    %1253 = vmatpush1.msra.mxu0 0.0
    %1254 = vmatprep.subr.mxu0 0.0
    %1255 = vmatpush1.msra.mxu0 0.0
    %1256 = vmatprep.subr.mxu0 0.0
    %1257 = vmatpush1.msra.mxu0 0.0
    %1258 = vmatprep.subr.mxu0 0.0
    %1259 = vmatpush1.msra.mxu0 0.0
    %1260 = vmatprep.subr.mxu0 0.0
    %1261 = vmatpush1.msra.mxu0 0.0
    %1262 = vmatprep.subr.mxu0 0.0
    %1263 = vmatpush1.msra.mxu0 0.0
    %1264 = vmatprep.subr.mxu0 0.0
    %1265 = vmatpush1.msra.mxu0 0.0
    %1266 = vmatprep.subr.mxu0 0.0
    %1267 = vmatpush1.msra.mxu0 0.0
    %1268 = vmatprep.subr.mxu0 0.0
    %1269 = vmatpush1.msra.mxu0 0.0
    %1270 = vmatprep.subr.mxu0 0.0
    %1271 = vmatpush1.msra.mxu0 0.0
    %1272 = vmatprep.subr.mxu0 0.0
    %1273 = vmatpush1.msra.mxu0 0.0
    %1274 = vmatprep.mubr.f32.mxu0 0.0
    %1275 = vmatmul.mubr.f32.gmra.mrb[0].mxu0 %v1202
    %v1276 = vpop.f32.mrb[0].mxu0
    %v1277 = vadd.f32 0.0, %v1276
    %v1278 = vpop.f32.mrb[0].mxu0
    %v1279 = vadd.f32 0.0, %v1278
    %1280 = vdwg.mxu0
    %1281 = vmatprep.subr.mxu0 %v434
    %1282 = vmatpush1.msra.mxu0 %v433
    %1283 = vmatprep.subr.mxu0 %v438
    %1284 = vmatpush1.msra.mxu0 %v437
    %1285 = vmatprep.subr.mxu0 %v442
    %1286 = vmatpush1.msra.mxu0 %v441
    %1287 = vmatprep.subr.mxu0 %v446
    %1288 = vmatpush1.msra.mxu0 %v445
    %1289 = vmatprep.subr.mxu0 %v450
    %1290 = vmatpush1.msra.mxu0 %v449
    %1291 = vmatprep.subr.mxu0 %v454
    %1292 = vmatpush1.msra.mxu0 %v453
    %1293 = vmatprep.subr.mxu0 %v458
    %1294 = vmatpush1.msra.mxu0 %v457
    %1295 = vmatprep.subr.mxu0 %v462
    %1296 = vmatpush1.msra.mxu0 %v461
    %1297 = vmatprep.subr.mxu0 %v466
    %1298 = vmatpush1.msra.mxu0 %v465
    %1299 = vmatprep.subr.mxu0 %v470
    %1300 = vmatpush1.msra.mxu0 %v469
    %1301 = vmatprep.subr.mxu0 %v474
    %1302 = vmatpush1.msra.mxu0 %v473
    %1303 = vmatprep.subr.mxu0 %v478
    %1304 = vmatpush1.msra.mxu0 %v477
    %1305 = vmatprep.subr.mxu0 %v482
    %1306 = vmatpush1.msra.mxu0 %v481
    %1307 = vmatprep.subr.mxu0 %v486
    %1308 = vmatpush1.msra.mxu0 %v485
    %1309 = vmatprep.subr.mxu0 %v490
    %1310 = vmatpush1.msra.mxu0 %v489
    %1311 = vmatprep.subr.mxu0 %v494
    %1312 = vmatpush1.msra.mxu0 %v493
    %1313 = vmatprep.subr.mxu0 0.0
    %1314 = vmatpush1.msra.mxu0 0.0
    %1315 = vmatprep.subr.mxu0 0.0
    %1316 = vmatpush1.msra.mxu0 0.0
    %1317 = vmatprep.subr.mxu0 0.0
    %1318 = vmatpush1.msra.mxu0 0.0
    %1319 = vmatprep.subr.mxu0 0.0
    %1320 = vmatpush1.msra.mxu0 0.0
    %1321 = vmatprep.subr.mxu0 0.0
    %1322 = vmatpush1.msra.mxu0 0.0
    %1323 = vmatprep.subr.mxu0 0.0
    %1324 = vmatpush1.msra.mxu0 0.0
    %1325 = vmatprep.subr.mxu0 0.0
    %1326 = vmatpush1.msra.mxu0 0.0
    %1327 = vmatprep.subr.mxu0 0.0
    %1328 = vmatpush1.msra.mxu0 0.0
    %1329 = vmatprep.subr.mxu0 0.0
    %1330 = vmatpush1.msra.mxu0 0.0
    %1331 = vmatprep.subr.mxu0 0.0
    %1332 = vmatpush1.msra.mxu0 0.0
    %1333 = vmatprep.subr.mxu0 0.0
    %1334 = vmatpush1.msra.mxu0 0.0
    %1335 = vmatprep.subr.mxu0 0.0
    %1336 = vmatpush1.msra.mxu0 0.0
    %1337 = vmatprep.subr.mxu0 0.0
    %1338 = vmatpush1.msra.mxu0 0.0
    %1339 = vmatprep.subr.mxu0 0.0
    %1340 = vmatpush1.msra.mxu0 0.0
    %1341 = vmatprep.subr.mxu0 0.0
    %1342 = vmatpush1.msra.mxu0 0.0
    %1343 = vmatprep.subr.mxu0 0.0
    %1344 = vmatpush1.msra.mxu0 0.0
    %1345 = vmatprep.mubr.f32.mxu0 0.0
    %1346 = vmatmul.mubr.f32.gmra.mrb[0].mxu0 %v1202
    %v1347 = vpop.f32.mrb[0].mxu0
    %v1348 = vadd.f32 0.0, %v1347
    %v1349 = vpop.f32.mrb[0].mxu0
    %v1350 = vadd.f32 0.0, %v1349
    %1351 = vdwg.mxu0
    %v1352 = vadd.f32 %v1206, %v1277
    %v1353 = vadd.f32 %v1207, %v1279
    %v1354 = vadd.f32 %v1208, %v1348
    %v1355 = vadd.f32 %v1209, %v1350
    %v1356 = vxor.u32 %v1352, 2147483648
    %v1357 = vxor.u32 %v1353, 2147483648
    %v1358 = vxor.u32 %v1354, 2147483648
    %v1359 = vmul.f32 %v1356, 1.442695
    %v1360 = vpow.pop %v1359
    %v1361 = vmul.f32 %v1357, 1.442695
    %v1362 = vpow.pop %v1361
    %v1363 = vmul.f32 %v1358, 1.442695
    %v1364 = vpow.pop %v1363
    %v1365 = vadd.f32 %v1360, 1.0
    %v1366 = vadd.f32 %v1362, 1.0
    %v1367 = vadd.f32 %v1364, 1.0
    %v1368 = vrcp.pop %v1365
    %v1369 = vmul.f32 1.0, %v1368
    %v1370 = vrcp.pop %v1366
    %v1371 = vmul.f32 1.0, %v1370
    %v1372 = vrcp.pop %v1367
    %v1373 = vmul.f32 1.0, %v1372
    %v1374 = vtanh.pop %v1355
    %v1375 = vmul.f32 %v1371, %v1200
    %v1376 = vmul.f32 %v1369, %v1374
    %v1377 = vadd.f32 %v1375, %v1376
    %v1378 = vtanh.pop %v1377
    %v1379 = vmul.f32 %v1373, %v1378
    %s1380 = smul.u32 5, 4
    %s1381 = smul.addr %s1380, 8
    %s1382 = scalar_lea.vmem [#allocation2], %s1381
    %v1383 = vld [vmem:[%s1382] sm:$0xff]
    %v1384 = vld [vmem:[%s1382 + $0x8] sm:$0xff]
    %v1385 = vld [vmem:[%s1382 + $0x10] sm:$0xff]
    %v1386 = vld [vmem:[%s1382 + $0x18] sm:$0xff]
    %1387 = vmatprep.subr.mxu0 %v432
    %1388 = vmatpush1.msra.mxu0 %v431
    %1389 = vmatprep.subr.mxu0 %v436
    %1390 = vmatpush1.msra.mxu0 %v435
    %1391 = vmatprep.subr.mxu0 %v440
    %1392 = vmatpush1.msra.mxu0 %v439
    %1393 = vmatprep.subr.mxu0 %v444
    %1394 = vmatpush1.msra.mxu0 %v443
    %1395 = vmatprep.subr.mxu0 %v448
    %1396 = vmatpush1.msra.mxu0 %v447
    %1397 = vmatprep.subr.mxu0 %v452
    %1398 = vmatpush1.msra.mxu0 %v451
    %1399 = vmatprep.subr.mxu0 %v456
    %1400 = vmatpush1.msra.mxu0 %v455
    %1401 = vmatprep.subr.mxu0 %v460
    %1402 = vmatpush1.msra.mxu0 %v459
    %1403 = vmatprep.subr.mxu0 %v464
    %1404 = vmatpush1.msra.mxu0 %v463
    %1405 = vmatprep.subr.mxu0 %v468
    %1406 = vmatpush1.msra.mxu0 %v467
    %1407 = vmatprep.subr.mxu0 %v472
    %1408 = vmatpush1.msra.mxu0 %v471
    %1409 = vmatprep.subr.mxu0 %v476
    %1410 = vmatpush1.msra.mxu0 %v475
    %1411 = vmatprep.subr.mxu0 %v480
    %1412 = vmatpush1.msra.mxu0 %v479
    %1413 = vmatprep.subr.mxu0 %v484
    %1414 = vmatpush1.msra.mxu0 %v483
    %1415 = vmatprep.subr.mxu0 %v488
    %1416 = vmatpush1.msra.mxu0 %v487
    %1417 = vmatprep.subr.mxu0 %v492
    %1418 = vmatpush1.msra.mxu0 %v491
    %1419 = vmatprep.subr.mxu0 0.0
    %1420 = vmatpush1.msra.mxu0 0.0
    %1421 = vmatprep.subr.mxu0 0.0
    %1422 = vmatpush1.msra.mxu0 0.0
    %1423 = vmatprep.subr.mxu0 0.0
    %1424 = vmatpush1.msra.mxu0 0.0
    %1425 = vmatprep.subr.mxu0 0.0
    %1426 = vmatpush1.msra.mxu0 0.0
    %1427 = vmatprep.subr.mxu0 0.0
    %1428 = vmatpush1.msra.mxu0 0.0
    %1429 = vmatprep.subr.mxu0 0.0
    %1430 = vmatpush1.msra.mxu0 0.0
    %1431 = vmatprep.subr.mxu0 0.0
    %1432 = vmatpush1.msra.mxu0 0.0
    %1433 = vmatprep.subr.mxu0 0.0
    %1434 = vmatpush1.msra.mxu0 0.0
    %1435 = vmatprep.subr.mxu0 0.0
    %1436 = vmatpush1.msra.mxu0 0.0
    %1437 = vmatprep.subr.mxu0 0.0
    %1438 = vmatpush1.msra.mxu0 0.0
    %1439 = vmatprep.subr.mxu0 0.0
    %1440 = vmatpush1.msra.mxu0 0.0
    %1441 = vmatprep.subr.mxu0 0.0
    %1442 = vmatpush1.msra.mxu0 0.0
    %1443 = vmatprep.subr.mxu0 0.0
    %1444 = vmatpush1.msra.mxu0 0.0
    %1445 = vmatprep.subr.mxu0 0.0
    %1446 = vmatpush1.msra.mxu0 0.0
    %1447 = vmatprep.subr.mxu0 0.0
    %1448 = vmatpush1.msra.mxu0 0.0
    %1449 = vmatprep.subr.mxu0 0.0
    %1450 = vmatpush1.msra.mxu0 0.0
    %1451 = vmatprep.mubr.f32.mxu0 0.0
    %1452 = vmatmul.mubr.f32.gmra.mrb[0].mxu0 %v1379
    %v1453 = vpop.f32.mrb[0].mxu0
    %v1454 = vadd.f32 0.0, %v1453
    %v1455 = vpop.f32.mrb[0].mxu0
    %v1456 = vadd.f32 0.0, %v1455
    %1457 = vdwg.mxu0
    %1458 = vmatprep.subr.mxu0 %v434
    %1459 = vmatpush1.msra.mxu0 %v433
    %1460 = vmatprep.subr.mxu0 %v438
    %1461 = vmatpush1.msra.mxu0 %v437
    %1462 = vmatprep.subr.mxu0 %v442
    %1463 = vmatpush1.msra.mxu0 %v441
    %1464 = vmatprep.subr.mxu0 %v446
    %1465 = vmatpush1.msra.mxu0 %v445
    %1466 = vmatprep.subr.mxu0 %v450
    %1467 = vmatpush1.msra.mxu0 %v449
    %1468 = vmatprep.subr.mxu0 %v454
    %1469 = vmatpush1.msra.mxu0 %v453
    %1470 = vmatprep.subr.mxu0 %v458
    %1471 = vmatpush1.msra.mxu0 %v457
    %1472 = vmatprep.subr.mxu0 %v462
    %1473 = vmatpush1.msra.mxu0 %v461
    %1474 = vmatprep.subr.mxu0 %v466
    %1475 = vmatpush1.msra.mxu0 %v465
    %1476 = vmatprep.subr.mxu0 %v470
    %1477 = vmatpush1.msra.mxu0 %v469
    %1478 = vmatprep.subr.mxu0 %v474
    %1479 = vmatpush1.msra.mxu0 %v473
    %1480 = vmatprep.subr.mxu0 %v478
    %1481 = vmatpush1.msra.mxu0 %v477
    %1482 = vmatprep.subr.mxu0 %v482
    %1483 = vmatpush1.msra.mxu0 %v481
    %1484 = vmatprep.subr.mxu0 %v486
    %1485 = vmatpush1.msra.mxu0 %v485
    %1486 = vmatprep.subr.mxu0 %v490
    %1487 = vmatpush1.msra.mxu0 %v489
    %1488 = vmatprep.subr.mxu0 %v494
    %1489 = vmatpush1.msra.mxu0 %v493
    %1490 = vmatprep.subr.mxu0 0.0
    %1491 = vmatpush1.msra.mxu0 0.0
    %1492 = vmatprep.subr.mxu0 0.0
    %1493 = vmatpush1.msra.mxu0 0.0
    %1494 = vmatprep.subr.mxu0 0.0
    %1495 = vmatpush1.msra.mxu0 0.0
    %1496 = vmatprep.subr.mxu0 0.0
    %1497 = vmatpush1.msra.mxu0 0.0
    %1498 = vmatprep.subr.mxu0 0.0
    %1499 = vmatpush1.msra.mxu0 0.0
    %1500 = vmatprep.subr.mxu0 0.0
    %1501 = vmatpush1.msra.mxu0 0.0
    %1502 = vmatprep.subr.mxu0 0.0
    %1503 = vmatpush1.msra.mxu0 0.0
    %1504 = vmatprep.subr.mxu0 0.0
    %1505 = vmatpush1.msra.mxu0 0.0
    %1506 = vmatprep.subr.mxu0 0.0
    %1507 = vmatpush1.msra.mxu0 0.0
    %1508 = vmatprep.subr.mxu0 0.0
    %1509 = vmatpush1.msra.mxu0 0.0
    %1510 = vmatprep.subr.mxu0 0.0
    %1511 = vmatpush1.msra.mxu0 0.0
    %1512 = vmatprep.subr.mxu0 0.0
    %1513 = vmatpush1.msra.mxu0 0.0
    %1514 = vmatprep.subr.mxu0 0.0
    %1515 = vmatpush1.msra.mxu0 0.0
    %1516 = vmatprep.subr.mxu0 0.0
    %1517 = vmatpush1.msra.mxu0 0.0
    %1518 = vmatprep.subr.mxu0 0.0
    %1519 = vmatpush1.msra.mxu0 0.0
    %1520 = vmatprep.subr.mxu0 0.0
    %1521 = vmatpush1.msra.mxu0 0.0
    %1522 = vmatprep.mubr.f32.mxu0 0.0
    %1523 = vmatmul.mubr.f32.gmra.mrb[0].mxu0 %v1379
    %v1524 = vpop.f32.mrb[0].mxu0
    %v1525 = vadd.f32 0.0, %v1524
    %v1526 = vpop.f32.mrb[0].mxu0
    %v1527 = vadd.f32 0.0, %v1526
    %1528 = vdwg.mxu0
    %v1529 = vadd.f32 %v1383, %v1454
    %v1530 = vadd.f32 %v1384, %v1456
    %v1531 = vadd.f32 %v1385, %v1525
    %v1532 = vadd.f32 %v1386, %v1527
    %v1533 = vxor.u32 %v1529, 2147483648
    %v1534 = vxor.u32 %v1530, 2147483648
    %v1535 = vxor.u32 %v1531, 2147483648
    %v1536 = vmul.f32 %v1533, 1.442695
    %v1537 = vpow.pop %v1536
    %v1538 = vmul.f32 %v1534, 1.442695
    %v1539 = vpow.pop %v1538
    %v1540 = vmul.f32 %v1535, 1.442695
    %v1541 = vpow.pop %v1540
    %v1542 = vadd.f32 %v1537, 1.0
    %v1543 = vadd.f32 %v1539, 1.0
    %v1544 = vadd.f32 %v1541, 1.0
    %v1545 = vrcp.pop %v1542
    %v1546 = vmul.f32 1.0, %v1545
    %v1547 = vrcp.pop %v1543
    %v1548 = vmul.f32 1.0, %v1547
    %v1549 = vrcp.pop %v1544
    %v1550 = vmul.f32 1.0, %v1549
    %v1551 = vtanh.pop %v1532
    %v1552 = vmul.f32 %v1548, %v1377
    %v1553 = vmul.f32 %v1546, %v1551
    %v1554 = vadd.f32 %v1552, %v1553
    %v1555 = vtanh.pop %v1554
    %v1556 = vmul.f32 %v1550, %v1555
    %s1557 = smul.u32 6, 4
    %s1558 = smul.addr %s1557, 8
    %s1559 = scalar_lea.vmem [#allocation2], %s1558
    %v1560 = vld [vmem:[%s1559] sm:$0xff]
    %v1561 = vld [vmem:[%s1559 + $0x8] sm:$0xff]
    %v1562 = vld [vmem:[%s1559 + $0x10] sm:$0xff]
    %v1563 = vld [vmem:[%s1559 + $0x18] sm:$0xff]
    %1564 = vmatprep.subr.mxu0 %v432
    %1565 = vmatpush1.msra.mxu0 %v431
    %1566 = vmatprep.subr.mxu0 %v436
    %1567 = vmatpush1.msra.mxu0 %v435
    %1568 = vmatprep.subr.mxu0 %v440
    %1569 = vmatpush1.msra.mxu0 %v439
    %1570 = vmatprep.subr.mxu0 %v444
    %1571 = vmatpush1.msra.mxu0 %v443
    %1572 = vmatprep.subr.mxu0 %v448
    %1573 = vmatpush1.msra.mxu0 %v447
    %1574 = vmatprep.subr.mxu0 %v452
    %1575 = vmatpush1.msra.mxu0 %v451
    %1576 = vmatprep.subr.mxu0 %v456
    %1577 = vmatpush1.msra.mxu0 %v455
    %1578 = vmatprep.subr.mxu0 %v460
    %1579 = vmatpush1.msra.mxu0 %v459
    %1580 = vmatprep.subr.mxu0 %v464
    %1581 = vmatpush1.msra.mxu0 %v463
    %1582 = vmatprep.subr.mxu0 %v468
    %1583 = vmatpush1.msra.mxu0 %v467
    %1584 = vmatprep.subr.mxu0 %v472
    %1585 = vmatpush1.msra.mxu0 %v471
    %1586 = vmatprep.subr.mxu0 %v476
    %1587 = vmatpush1.msra.mxu0 %v475
    %1588 = vmatprep.subr.mxu0 %v480
    %1589 = vmatpush1.msra.mxu0 %v479
    %1590 = vmatprep.subr.mxu0 %v484
    %1591 = vmatpush1.msra.mxu0 %v483
    %1592 = vmatprep.subr.mxu0 %v488
    %1593 = vmatpush1.msra.mxu0 %v487
    %1594 = vmatprep.subr.mxu0 %v492
    %1595 = vmatpush1.msra.mxu0 %v491
    %1596 = vmatprep.subr.mxu0 0.0
    %1597 = vmatpush1.msra.mxu0 0.0
    %1598 = vmatprep.subr.mxu0 0.0
    %1599 = vmatpush1.msra.mxu0 0.0
    %1600 = vmatprep.subr.mxu0 0.0
    %1601 = vmatpush1.msra.mxu0 0.0
    %1602 = vmatprep.subr.mxu0 0.0
    %1603 = vmatpush1.msra.mxu0 0.0
    %1604 = vmatprep.subr.mxu0 0.0
    %1605 = vmatpush1.msra.mxu0 0.0
    %1606 = vmatprep.subr.mxu0 0.0
    %1607 = vmatpush1.msra.mxu0 0.0
    %1608 = vmatprep.subr.mxu0 0.0
    %1609 = vmatpush1.msra.mxu0 0.0
    %1610 = vmatprep.subr.mxu0 0.0
    %1611 = vmatpush1.msra.mxu0 0.0
    %1612 = vmatprep.subr.mxu0 0.0
    %1613 = vmatpush1.msra.mxu0 0.0
    %1614 = vmatprep.subr.mxu0 0.0
    %1615 = vmatpush1.msra.mxu0 0.0
    %1616 = vmatprep.subr.mxu0 0.0
    %1617 = vmatpush1.msra.mxu0 0.0
    %1618 = vmatprep.subr.mxu0 0.0
    %1619 = vmatpush1.msra.mxu0 0.0
    %1620 = vmatprep.subr.mxu0 0.0
    %1621 = vmatpush1.msra.mxu0 0.0
    %1622 = vmatprep.subr.mxu0 0.0
    %1623 = vmatpush1.msra.mxu0 0.0
    %1624 = vmatprep.subr.mxu0 0.0
    %1625 = vmatpush1.msra.mxu0 0.0
    %1626 = vmatprep.subr.mxu0 0.0
    %1627 = vmatpush1.msra.mxu0 0.0
    %1628 = vmatprep.mubr.f32.mxu0 0.0
    %1629 = vmatmul.mubr.f32.gmra.mrb[0].mxu0 %v1556
    %v1630 = vpop.f32.mrb[0].mxu0
    %v1631 = vadd.f32 0.0, %v1630
    %v1632 = vpop.f32.mrb[0].mxu0
    %v1633 = vadd.f32 0.0, %v1632
    %1634 = vdwg.mxu0
    %1635 = vmatprep.subr.mxu0 %v434
    %1636 = vmatpush1.msra.mxu0 %v433
    %1637 = vmatprep.subr.mxu0 %v438
    %1638 = vmatpush1.msra.mxu0 %v437
    %1639 = vmatprep.subr.mxu0 %v442
    %1640 = vmatpush1.msra.mxu0 %v441
    %1641 = vmatprep.subr.mxu0 %v446
    %1642 = vmatpush1.msra.mxu0 %v445
    %1643 = vmatprep.subr.mxu0 %v450
    %1644 = vmatpush1.msra.mxu0 %v449
    %1645 = vmatprep.subr.mxu0 %v454
    %1646 = vmatpush1.msra.mxu0 %v453
    %1647 = vmatprep.subr.mxu0 %v458
    %1648 = vmatpush1.msra.mxu0 %v457
    %1649 = vmatprep.subr.mxu0 %v462
    %1650 = vmatpush1.msra.mxu0 %v461
    %1651 = vmatprep.subr.mxu0 %v466
    %1652 = vmatpush1.msra.mxu0 %v465
    %1653 = vmatprep.subr.mxu0 %v470
    %1654 = vmatpush1.msra.mxu0 %v469
    %1655 = vmatprep.subr.mxu0 %v474
    %1656 = vmatpush1.msra.mxu0 %v473
    %1657 = vmatprep.subr.mxu0 %v478
    %1658 = vmatpush1.msra.mxu0 %v477
    %1659 = vmatprep.subr.mxu0 %v482
    %1660 = vmatpush1.msra.mxu0 %v481
    %1661 = vmatprep.subr.mxu0 %v486
    %1662 = vmatpush1.msra.mxu0 %v485
    %1663 = vmatprep.subr.mxu0 %v490
    %1664 = vmatpush1.msra.mxu0 %v489
    %1665 = vmatprep.subr.mxu0 %v494
    %1666 = vmatpush1.msra.mxu0 %v493
    %1667 = vmatprep.subr.mxu0 0.0
    %1668 = vmatpush1.msra.mxu0 0.0
    %1669 = vmatprep.subr.mxu0 0.0
    %1670 = vmatpush1.msra.mxu0 0.0
    %1671 = vmatprep.subr.mxu0 0.0
    %1672 = vmatpush1.msra.mxu0 0.0
    %1673 = vmatprep.subr.mxu0 0.0
    %1674 = vmatpush1.msra.mxu0 0.0
    %1675 = vmatprep.subr.mxu0 0.0
    %1676 = vmatpush1.msra.mxu0 0.0
    %1677 = vmatprep.subr.mxu0 0.0
    %1678 = vmatpush1.msra.mxu0 0.0
    %1679 = vmatprep.subr.mxu0 0.0
    %1680 = vmatpush1.msra.mxu0 0.0
    %1681 = vmatprep.subr.mxu0 0.0
    %1682 = vmatpush1.msra.mxu0 0.0
    %1683 = vmatprep.subr.mxu0 0.0
    %1684 = vmatpush1.msra.mxu0 0.0
    %1685 = vmatprep.subr.mxu0 0.0
    %1686 = vmatpush1.msra.mxu0 0.0
    %1687 = vmatprep.subr.mxu0 0.0
    %1688 = vmatpush1.msra.mxu0 0.0
    %1689 = vmatprep.subr.mxu0 0.0
    %1690 = vmatpush1.msra.mxu0 0.0
    %1691 = vmatprep.subr.mxu0 0.0
    %1692 = vmatpush1.msra.mxu0 0.0
    %1693 = vmatprep.subr.mxu0 0.0
    %1694 = vmatpush1.msra.mxu0 0.0
    %1695 = vmatprep.subr.mxu0 0.0
    %1696 = vmatpush1.msra.mxu0 0.0
    %1697 = vmatprep.subr.mxu0 0.0
    %1698 = vmatpush1.msra.mxu0 0.0
    %1699 = vmatprep.mubr.f32.mxu0 0.0
    %1700 = vmatmul.mubr.f32.gmra.mrb[0].mxu0 %v1556
    %v1701 = vpop.f32.mrb[0].mxu0
    %v1702 = vadd.f32 0.0, %v1701
    %v1703 = vpop.f32.mrb[0].mxu0
    %v1704 = vadd.f32 0.0, %v1703
    %1705 = vdwg.mxu0
    %v1706 = vadd.f32 %v1560, %v1631
    %v1707 = vadd.f32 %v1561, %v1633
    %v1708 = vadd.f32 %v1562, %v1702
    %v1709 = vadd.f32 %v1563, %v1704
    %v1710 = vxor.u32 %v1706, 2147483648
    %v1711 = vxor.u32 %v1707, 2147483648
    %v1712 = vxor.u32 %v1708, 2147483648
    %v1713 = vmul.f32 %v1710, 1.442695
    %v1714 = vpow.pop %v1713
    %v1715 = vmul.f32 %v1711, 1.442695
    %v1716 = vpow.pop %v1715
    %v1717 = vmul.f32 %v1712, 1.442695
    %v1718 = vpow.pop %v1717
    %v1719 = vadd.f32 %v1714, 1.0
    %v1720 = vadd.f32 %v1716, 1.0
    %v1721 = vadd.f32 %v1718, 1.0
    %v1722 = vrcp.pop %v1719
    %v1723 = vmul.f32 1.0, %v1722
    %v1724 = vrcp.pop %v1720
    %v1725 = vmul.f32 1.0, %v1724
    %v1726 = vrcp.pop %v1721
    %v1727 = vmul.f32 1.0, %v1726
    %v1728 = vtanh.pop %v1709
    %v1729 = vmul.f32 %v1725, %v1554
    %v1730 = vmul.f32 %v1723, %v1728
    %v1731 = vadd.f32 %v1729, %v1730
    %v1732 = vtanh.pop %v1731
    %v1733 = vmul.f32 %v1727, %v1732
    %s1734 = smul.u32 7, 4
    %s1735 = smul.addr %s1734, 8
    %s1736 = scalar_lea.vmem [#allocation2], %s1735
    %v1737 = vld [vmem:[%s1736] sm:$0xff]
    %v1738 = vld [vmem:[%s1736 + $0x8] sm:$0xff]
    %v1739 = vld [vmem:[%s1736 + $0x10] sm:$0xff]
    %v1740 = vld [vmem:[%s1736 + $0x18] sm:$0xff]
    %1741 = vmatprep.subr.mxu0 %v432
    %1742 = vmatpush1.msra.mxu0 %v431
    %1743 = vmatprep.subr.mxu0 %v436
    %1744 = vmatpush1.msra.mxu0 %v435
    %1745 = vmatprep.subr.mxu0 %v440
    %1746 = vmatpush1.msra.mxu0 %v439
    %1747 = vmatprep.subr.mxu0 %v444
    %1748 = vmatpush1.msra.mxu0 %v443
    %1749 = vmatprep.subr.mxu0 %v448
    %1750 = vmatpush1.msra.mxu0 %v447
    %1751 = vmatprep.subr.mxu0 %v452
    %1752 = vmatpush1.msra.mxu0 %v451
    %1753 = vmatprep.subr.mxu0 %v456
    %1754 = vmatpush1.msra.mxu0 %v455
    %1755 = vmatprep.subr.mxu0 %v460
    %1756 = vmatpush1.msra.mxu0 %v459
    %1757 = vmatprep.subr.mxu0 %v464
    %1758 = vmatpush1.msra.mxu0 %v463
    %1759 = vmatprep.subr.mxu0 %v468
    %1760 = vmatpush1.msra.mxu0 %v467
    %1761 = vmatprep.subr.mxu0 %v472
    %1762 = vmatpush1.msra.mxu0 %v471
    %1763 = vmatprep.subr.mxu0 %v476
    %1764 = vmatpush1.msra.mxu0 %v475
    %1765 = vmatprep.subr.mxu0 %v480
    %1766 = vmatpush1.msra.mxu0 %v479
    %1767 = vmatprep.subr.mxu0 %v484
    %1768 = vmatpush1.msra.mxu0 %v483
    %1769 = vmatprep.subr.mxu0 %v488
    %1770 = vmatpush1.msra.mxu0 %v487
    %1771 = vmatprep.subr.mxu0 %v492
    %1772 = vmatpush1.msra.mxu0 %v491
    %1773 = vmatprep.subr.mxu0 0.0
    %1774 = vmatpush1.msra.mxu0 0.0
    %1775 = vmatprep.subr.mxu0 0.0
    %1776 = vmatpush1.msra.mxu0 0.0
    %1777 = vmatprep.subr.mxu0 0.0
    %1778 = vmatpush1.msra.mxu0 0.0
    %1779 = vmatprep.subr.mxu0 0.0
    %1780 = vmatpush1.msra.mxu0 0.0
    %1781 = vmatprep.subr.mxu0 0.0
    %1782 = vmatpush1.msra.mxu0 0.0
    %1783 = vmatprep.subr.mxu0 0.0
    %1784 = vmatpush1.msra.mxu0 0.0
    %1785 = vmatprep.subr.mxu0 0.0
    %1786 = vmatpush1.msra.mxu0 0.0
    %1787 = vmatprep.subr.mxu0 0.0
    %1788 = vmatpush1.msra.mxu0 0.0
    %1789 = vmatprep.subr.mxu0 0.0
    %1790 = vmatpush1.msra.mxu0 0.0
    %1791 = vmatprep.subr.mxu0 0.0
    %1792 = vmatpush1.msra.mxu0 0.0
    %1793 = vmatprep.subr.mxu0 0.0
    %1794 = vmatpush1.msra.mxu0 0.0
    %1795 = vmatprep.subr.mxu0 0.0
    %1796 = vmatpush1.msra.mxu0 0.0
    %1797 = vmatprep.subr.mxu0 0.0
    %1798 = vmatpush1.msra.mxu0 0.0
    %1799 = vmatprep.subr.mxu0 0.0
    %1800 = vmatpush1.msra.mxu0 0.0
    %1801 = vmatprep.subr.mxu0 0.0
    %1802 = vmatpush1.msra.mxu0 0.0
    %1803 = vmatprep.subr.mxu0 0.0
    %1804 = vmatpush1.msra.mxu0 0.0
    %1805 = vmatprep.mubr.f32.mxu0 0.0
    %1806 = vmatmul.mubr.f32.gmra.mrb[0].mxu0 %v1733
    %v1807 = vpop.f32.mrb[0].mxu0
    %v1808 = vadd.f32 0.0, %v1807
    %v1809 = vpop.f32.mrb[0].mxu0
    %v1810 = vadd.f32 0.0, %v1809
    %1811 = vdwg.mxu0
    %1812 = vmatprep.subr.mxu0 %v434
    %1813 = vmatpush1.msra.mxu0 %v433
    %1814 = vmatprep.subr.mxu0 %v438
    %1815 = vmatpush1.msra.mxu0 %v437
    %1816 = vmatprep.subr.mxu0 %v442
    %1817 = vmatpush1.msra.mxu0 %v441
    %1818 = vmatprep.subr.mxu0 %v446
    %1819 = vmatpush1.msra.mxu0 %v445
    %1820 = vmatprep.subr.mxu0 %v450
    %1821 = vmatpush1.msra.mxu0 %v449
    %1822 = vmatprep.subr.mxu0 %v454
    %1823 = vmatpush1.msra.mxu0 %v453
    %1824 = vmatprep.subr.mxu0 %v458
    %1825 = vmatpush1.msra.mxu0 %v457
    %1826 = vmatprep.subr.mxu0 %v462
    %1827 = vmatpush1.msra.mxu0 %v461
    %1828 = vmatprep.subr.mxu0 %v466
    %1829 = vmatpush1.msra.mxu0 %v465
    %1830 = vmatprep.subr.mxu0 %v470
    %1831 = vmatpush1.msra.mxu0 %v469
    %1832 = vmatprep.subr.mxu0 %v474
    %1833 = vmatpush1.msra.mxu0 %v473
    %1834 = vmatprep.subr.mxu0 %v478
    %1835 = vmatpush1.msra.mxu0 %v477
    %1836 = vmatprep.subr.mxu0 %v482
    %1837 = vmatpush1.msra.mxu0 %v481
    %1838 = vmatprep.subr.mxu0 %v486
    %1839 = vmatpush1.msra.mxu0 %v485
    %1840 = vmatprep.subr.mxu0 %v490
    %1841 = vmatpush1.msra.mxu0 %v489
    %1842 = vmatprep.subr.mxu0 %v494
    %1843 = vmatpush1.msra.mxu0 %v493
    %1844 = vmatprep.subr.mxu0 0.0
    %1845 = vmatpush1.msra.mxu0 0.0
    %1846 = vmatprep.subr.mxu0 0.0
    %1847 = vmatpush1.msra.mxu0 0.0
    %1848 = vmatprep.subr.mxu0 0.0
    %1849 = vmatpush1.msra.mxu0 0.0
    %1850 = vmatprep.subr.mxu0 0.0
    %1851 = vmatpush1.msra.mxu0 0.0
    %1852 = vmatprep.subr.mxu0 0.0
    %1853 = vmatpush1.msra.mxu0 0.0
    %1854 = vmatprep.subr.mxu0 0.0
    %1855 = vmatpush1.msra.mxu0 0.0
    %1856 = vmatprep.subr.mxu0 0.0
    %1857 = vmatpush1.msra.mxu0 0.0
    %1858 = vmatprep.subr.mxu0 0.0
    %1859 = vmatpush1.msra.mxu0 0.0
    %1860 = vmatprep.subr.mxu0 0.0
    %1861 = vmatpush1.msra.mxu0 0.0
    %1862 = vmatprep.subr.mxu0 0.0
    %1863 = vmatpush1.msra.mxu0 0.0
    %1864 = vmatprep.subr.mxu0 0.0
    %1865 = vmatpush1.msra.mxu0 0.0
    %1866 = vmatprep.subr.mxu0 0.0
    %1867 = vmatpush1.msra.mxu0 0.0
    %1868 = vmatprep.subr.mxu0 0.0
    %1869 = vmatpush1.msra.mxu0 0.0
    %1870 = vmatprep.subr.mxu0 0.0
    %1871 = vmatpush1.msra.mxu0 0.0
    %1872 = vmatprep.subr.mxu0 0.0
    %1873 = vmatpush1.msra.mxu0 0.0
    %1874 = vmatprep.subr.mxu0 0.0
    %1875 = vmatpush1.msra.mxu0 0.0
    %1876 = vmatprep.mubr.f32.mxu0 0.0
    %1877 = vmatmul.mubr.f32.gmra.mrb[0].mxu0 %v1733
    %v1878 = vpop.f32.mrb[0].mxu0
    %v1879 = vadd.f32 0.0, %v1878
    %v1880 = vpop.f32.mrb[0].mxu0
    %v1881 = vadd.f32 0.0, %v1880
    %1882 = vdwg.mxu0
    %v1883 = vadd.f32 %v1737, %v1808
    %v1884 = vadd.f32 %v1738, %v1810
    %v1885 = vadd.f32 %v1739, %v1879
    %v1886 = vadd.f32 %v1740, %v1881
    %v1887 = vxor.u32 %v1883, 2147483648
    %v1888 = vxor.u32 %v1884, 2147483648
    %v1889 = vxor.u32 %v1885, 2147483648
    %v1890 = vmul.f32 %v1887, 1.442695
    %v1891 = vpow.pop %v1890
    %v1892 = vmul.f32 %v1888, 1.442695
    %v1893 = vpow.pop %v1892
    %v1894 = vmul.f32 %v1889, 1.442695
    %v1895 = vpow.pop %v1894
    %v1896 = vadd.f32 %v1891, 1.0
    %v1897 = vadd.f32 %v1893, 1.0
    %v1898 = vadd.f32 %v1895, 1.0
    %v1899 = vrcp.pop %v1896
    %v1900 = vmul.f32 1.0, %v1899
    %v1901 = vrcp.pop %v1897
    %v1902 = vmul.f32 1.0, %v1901
    %v1903 = vrcp.pop %v1898
    %v1904 = vmul.f32 1.0, %v1903
    %v1905 = vtanh.pop %v1886
    %v1906 = vmul.f32 %v1902, %v1731
    %v1907 = vmul.f32 %v1900, %v1905
    %v1908 = vadd.f32 %v1906, %v1907
    %v1909 = vtanh.pop %v1908
    %v1910 = vmul.f32 %v1904, %v1909
    %v1911 = vld [vmem:[#allocation9] sm:$0xff]
    %v1912 = vld [vmem:[#allocation9 + $0x8] sm:$0xff]
    %v1913 = vld [vmem:[#allocation9 + $0x10] sm:$0xff]
    %v1914 = vld [vmem:[#allocation9 + $0x18] sm:$0xff]
    %v1915 = vld [vmem:[#allocation9 + $0x20] sm:$0xff]
    %v1916 = vld [vmem:[#allocation9 + $0x28] sm:$0xff]
    %v1917 = vld [vmem:[#allocation9 + $0x30] sm:$0xff]
    %v1918 = vld [vmem:[#allocation9 + $0x38] sm:$0xff]
    %v1919 = vld [vmem:[#allocation9 + $0x40] sm:$0xff]
    %v1920 = vld [vmem:[#allocation9 + $0x48] sm:$0xff]
    %v1921 = vld [vmem:[#allocation9 + $0x50] sm:$0xff]
    %v1922 = vld [vmem:[#allocation9 + $0x58] sm:$0xff]
    %v1923 = vld [vmem:[#allocation9 + $0x60] sm:$0xff]
    %v1924 = vld [vmem:[#allocation9 + $0x68] sm:$0xff]
    %v1925 = vld [vmem:[#allocation9 + $0x70] sm:$0xff]
    %v1926 = vld [vmem:[#allocation9 + $0x78] sm:$0xff]
    %v1927 = vld [vmem:[%s5] sm:$0x1]
    %v1929 = vlaneseq
    %v1930 = vshrl.u32 %v1929, 7
    %v1931 = vsub.s32 0, %v1930
    %v1932 = vrot.slane %v1927, %v1931
    %1934 = vmatprep.subr.mxu0 0.0
    %1935 = vmatpush1.msra.mxu0 %v1911
    %1936 = vmatprep.subr.mxu0 0.0
    %1937 = vmatpush1.msra.mxu0 %v1912
    %1938 = vmatprep.subr.mxu0 0.0
    %1939 = vmatpush1.msra.mxu0 %v1913
    %1940 = vmatprep.subr.mxu0 0.0
    %1941 = vmatpush1.msra.mxu0 %v1914
    %1942 = vmatprep.subr.mxu0 0.0
    %1943 = vmatpush1.msra.mxu0 %v1915
    %1944 = vmatprep.subr.mxu0 0.0
    %1945 = vmatpush1.msra.mxu0 %v1916
    %1946 = vmatprep.subr.mxu0 0.0
    %1947 = vmatpush1.msra.mxu0 %v1917
    %1948 = vmatprep.subr.mxu0 0.0
    %1949 = vmatpush1.msra.mxu0 %v1918
    %1950 = vmatprep.subr.mxu0 0.0
    %1951 = vmatpush1.msra.mxu0 %v1919
    %1952 = vmatprep.subr.mxu0 0.0
    %1953 = vmatpush1.msra.mxu0 %v1920
    %1954 = vmatprep.subr.mxu0 0.0
    %1955 = vmatpush1.msra.mxu0 %v1921
    %1956 = vmatprep.subr.mxu0 0.0
    %1957 = vmatpush1.msra.mxu0 %v1922
    %1958 = vmatprep.subr.mxu0 0.0
    %1959 = vmatpush1.msra.mxu0 %v1923
    %1960 = vmatprep.subr.mxu0 0.0
    %1961 = vmatpush1.msra.mxu0 %v1924
    %1962 = vmatprep.subr.mxu0 0.0
    %1963 = vmatpush1.msra.mxu0 %v1925
    %1964 = vmatprep.subr.mxu0 0.0
    %1965 = vmatpush1.msra.mxu0 %v1926
    %1966 = vmatprep.subr.mxu0 0.0
    %1967 = vmatpush1.msra.mxu0 0.0
    %1968 = vmatprep.subr.mxu0 0.0
    %1969 = vmatpush1.msra.mxu0 0.0
    %1970 = vmatprep.subr.mxu0 0.0
    %1971 = vmatpush1.msra.mxu0 0.0
    %1972 = vmatprep.subr.mxu0 0.0
    %1973 = vmatpush1.msra.mxu0 0.0
    %1974 = vmatprep.subr.mxu0 0.0
    %1975 = vmatpush1.msra.mxu0 0.0
    %1976 = vmatprep.subr.mxu0 0.0
    %1977 = vmatpush1.msra.mxu0 0.0
    %1978 = vmatprep.subr.mxu0 0.0
    %1979 = vmatpush1.msra.mxu0 0.0
    %1980 = vmatprep.subr.mxu0 0.0
    %1981 = vmatpush1.msra.mxu0 0.0
    %1982 = vmatprep.subr.mxu0 0.0
    %1983 = vmatpush1.msra.mxu0 0.0
    %1984 = vmatprep.subr.mxu0 0.0
    %1985 = vmatpush1.msra.mxu0 0.0
    %1986 = vmatprep.subr.mxu0 0.0
    %1987 = vmatpush1.msra.mxu0 0.0
    %1988 = vmatprep.subr.mxu0 0.0
    %1989 = vmatpush1.msra.mxu0 0.0
    %1990 = vmatprep.subr.mxu0 0.0
    %1991 = vmatpush1.msra.mxu0 0.0
    %1992 = vmatprep.subr.mxu0 0.0
    %1993 = vmatpush1.msra.mxu0 0.0
    %1994 = vmatprep.subr.mxu0 0.0
    %1995 = vmatpush1.msra.mxu0 0.0
    %1996 = vmatprep.subr.mxu0 0.0
    %1997 = vmatpush1.msra.mxu0 0.0
    %1998 = vmatprep.mubr.f32.mxu0 0.0
    %1999 = vmatmul.mubr.f32.gmra.mrb[0].mxu0 %v1910
    %v2000 = vpop.f32.mrb[0].mxu0
    %v2001 = vadd.f32 %v1932, %v2000
    %v2002 = vpop.f32.mrb[0].mxu0
    %2003 = vdwg.mxu0
    %2004 = vst [vmem:[#allocation11] sm:$0xff] %v2001
    // Predicated region
    $region42: #{tpu_custom_call.1} parent=1 // pred_check
      _
    $region43: #{tpu_custom_call.1} parent=1 // pred_check_branch
      %2006 = sbr.rel (0) target = $region45
    $region44: #{tpu_custom_call.1} parent=1 // pred_region
      %s2008 = ssub.s32 128, 128
      %2009 = vsyncadd [#allocation5], %s2008
      %s2011 = sshll.u32 [#allocation11], 4
      %s2012 = int_to_ptr.vmem [resolvable:$true] %s2011
      %2014 = dma.vmem_to_hbm [thread:$0]  %s2012, 128, %s6, [#allocation5]
    $region45: #{tpu_custom_call.1} parent=1 // pred_fallthru
      _
    // Predicated region
    $region46: #{tpu_custom_call.1} parent=1 // pred_check
      _
    $region47: #{tpu_custom_call.1} parent=1 // pred_check_branch
      %2016 = sbr.rel (0) target = $region49
    $region48: #{tpu_custom_call.1} parent=1 // pred_region
      %2017 = dma.done [#allocation5], 128
    $region49: #{tpu_custom_call.1} parent=1 // pred_fallthru
      _
    %2018 = vsyncpa [#allocation4], 1
    %2019 = vsyncpa [#allocation7], 1
    %2020 = vsyncpa [#allocation10], 1
    %2021 = vsyncpa [#allocation5], 1

</llo_original>
